<compile_context>
chip_gen: v7x
topology: tpu7x:2x2x1
jax: 0.10.0
libtpu: 0.0.40
codegen_flags: <defaults>
</compile_context>

<pallas_src>
import functools

import jax
import jax.numpy as jnp
import numpy as np
from jax.experimental import pallas as pl
from jax.experimental.pallas import tpu as pltpu


def _encoder_adapter_kernel(x_ref, w1t_ref, b1_ref, w2t_ref, b2_ref,
                            gamma_ref, beta_ref, w3f_ref, b3_ref,
                            o_ref, flat_ref, *, n, c4, n4):
    k = c4 * n4
    bt = x_ref.shape[0] // n
    cdt = w1t_ref.dtype                       # streaming / MXU-input dtype

    # ---- Linear(embed_dim -> embed_dim//4) ---------------------------------
    # x arrives pre-flattened as [Bt*N, C]: one 2D MXU matmul, M = Bt*N rows,
    # f32 accumulation.
    h1 = jnp.dot(x_ref[...], w1t_ref[...],
                 preferred_element_type=jnp.float32)           # [Bt*N, C4]
    h1 = h1 + b1_ref[...]                                      # f32

    # ---- Rearrange 'b n c -> b c n' -----------------------------------------
    # Leading-dim split, transpose of the two minor dims (XLU), leading-dim
    # merge; the minor (lane) dim is never merged, so these stay cheap.
    h1 = h1.reshape(bt, n, c4)
    h1 = jnp.transpose(h1, (0, 2, 1))                          # [Bt, C4, N]
    h1 = h1.reshape(bt * c4, n)

    # ---- Linear(num_patches -> num_patches//4) -------------------------------
    # Second 2D MXU matmul, M = Bt*C4 rows; the (b, c) row order already
    # matches PyTorch's '(c n)' flatten order.
    h2 = jnp.dot(h1.astype(cdt), w2t_ref[...],
                 preferred_element_type=jnp.float32)           # [Bt*C4, N4]
    h2 = h2 + b2_ref[...]                                      # f32

    # ---- GELU (exact erf, nn.GELU() default) ---------------------------------
    # (Switch to tanh-approx GELU for EUP offload if bit-faithfulness to the
    #  PyTorch default is not required.)
    a = 0.5 * h2 * (1.0 + jax.lax.erf(h2 * 0.7071067811865476))

    # ---- LayerNorm([C4, N4]) --------------------------------------------------
    # Normalize over the whole C4*N4 slab per batch element; fused single pass
    # (sum + sum of squares), biased variance, eps = 1e-5 (PyTorch default).
    a3 = a.reshape(bt, c4, n4)                                 # leading split
    inv = 1.0 / float(k)
    s1 = jnp.sum(jnp.sum(a3, axis=2, keepdims=True), axis=1, keepdims=True)
    s2 = jnp.sum(jnp.sum(a3 * a3, axis=2, keepdims=True), axis=1, keepdims=True)
    mean = s1 * inv
    var = s2 * inv - mean * mean
    h3 = ((a3 - mean) * jax.lax.rsqrt(var + 1e-5)
          * gamma_ref[...][None, :, :] + beta_ref[...][None, :, :])  # [Bt,C4,N4]

    # ---- Rearrange 'b c n -> b (c n)' -----------------------------------------
    # Inherently a sublane->lane relayout: stage once through a small VMEM
    # slab (C4 stores of the natural [Bt, N4] matmul-output tiles), then feed
    # the final matmul from the slab.
    # TODO(synk): use an in-register h3.reshape(bt, k) once Mosaic shape-cast
    # support for non-128-aligned minor-dim merges is confirmed; that removes
    # the Bt*K*4-byte scratch and this store/reload.
    for c in range(c4):            # static & small; unrolled
        flat_ref[:, c * n4:(c + 1) * n4] = h3[:, c, :]

    # ---- Linear(embed_dim*num_patches//16 -> d_a*d_m) --------------------------
    # ONE lane-dense MXU matmul, M = Bt rows, output width Dp (128-multiple).
    out = jnp.dot(flat_ref[...].astype(w3f_ref.dtype), w3f_ref[...],
                  preferred_element_type=jnp.float32)          # [Bt, Dp]
    o_ref[...] = (out + b3_ref[...]).astype(o_ref.dtype)


def _pick_batch_tile(batch, block_b):
    """Batch tile: multiple of 8 (f32 sublanes), <= block_b, and >= 2 grid
    steps when the batch allows it (so the v7x dual TensorCores both work)."""
    if batch <= 8:
        return batch
    half = -(-batch // 2)                      # ceil(batch / 2)
    return max(8, (min(block_b, half) // 8) * 8)


def encoder_adapter(x, params, *, d_m, d_a, block_b=128,
                    compute_dtype=jnp.bfloat16,
                    vmem_limit_bytes=48 * 1024 * 1024):
    """Pallas implementation of EncoderAdapter.forward.

    x: [B, num_patches, embed_dim] float32
    params: PyTorch-convention weights (w1, b1, w2, b2, gamma, beta, w3, b3).
    compute_dtype: dtype used to stream x / W1 / W2 / W3 into the MXU
        (bf16 default; f32 for exact math). Accumulation and all elementwise
        math stay f32.
    vmem_limit_bytes: 48 MiB default (safe on v7x's 64 MiB per-TC VMEM);
        raise toward ~100 MiB on v5e/v6e and grow block_b accordingly.
    returns: [B, d_m, d_a] float32
    """
    B, N, C = x.shape
    C4, N4 = C // 4, N // 4
    D = d_m * d_a
    K = C4 * N4
    Dp = ((D + 127) // 128) * 128              # lane-dense output width
    w1, b1, w2, b2, gamma, beta, w3, b3 = params

    Bt = _pick_batch_tile(B, block_b)
    B_pad = int(pl.cdiv(B, Bt)) * Bt
    xp = x if B_pad == B else jnp.pad(x, ((0, B_pad - B), (0, 0), (0, 0)))
    # Flatten batch x patches in the wrapper (free in XLA) so the first
    # contraction is a single 2D matmul with M = Bt*N inside the kernel.
    x2d = xp.reshape(B_pad * N, C).astype(compute_dtype)

    # --- parameter pre-processing (plain JAX, once, outside the kernel) ------
    f32 = jnp.float32
    w1t = jnp.transpose(w1).astype(compute_dtype)              # [C, C4]
    b1r = b1.astype(f32).reshape(1, C4)
    w2t = jnp.transpose(w2).astype(compute_dtype)              # [N, N4]
    b2r = b2.astype(f32).reshape(1, N4)
    gammar = gamma.astype(f32)                                 # [C4, N4]
    betar = beta.astype(f32)                                   # [C4, N4]
    # The kernel's flat column order is c*N4 + p == PyTorch '(c n)': W3 needs
    # only a transpose (no permutation), padded to the lane-dense width.
    w3f = jnp.pad(jnp.transpose(w3).astype(f32),
                  ((0, 0), (0, Dp - D))).astype(compute_dtype)  # [K, Dp]
    b3r = jnp.pad(b3.astype(f32).reshape(1, D), ((0, 0), (0, Dp - D)))

    kernel = functools.partial(_encoder_adapter_kernel, n=N, c4=C4, n4=N4)
    const = lambda i: (0, 0)                   # weights: same full block each step

    out = pl.pallas_call(
        kernel,
        out_shape=jax.ShapeDtypeStruct((B_pad, Dp), jnp.float32),
        grid_spec=pltpu.PrefetchScalarGridSpec(
            num_scalar_prefetch=0,
            grid=(B_pad // Bt,),
            in_specs=[
                pl.BlockSpec((Bt * N, C), lambda i: (i, 0)),   # x (per-step stream)
                pl.BlockSpec((C, C4), const),                  # W1^T
                pl.BlockSpec((1, C4), const),                  # b1
                pl.BlockSpec((N, N4), const),                  # W2^T
                pl.BlockSpec((1, N4), const),                  # b2
                pl.BlockSpec((C4, N4), const),                 # LN gamma
                pl.BlockSpec((C4, N4), const),                 # LN beta
                pl.BlockSpec((K, Dp), const),                  # W3 (flat, padded)
                pl.BlockSpec((1, Dp), const),                  # b3 (padded)
            ],
            out_specs=pl.BlockSpec((Bt, Dp), lambda i: (i, 0)),
            scratch_shapes=[pltpu.VMEM((Bt, K), jnp.float32)],  # flatten slab
        ),
        compiler_params=pltpu.CompilerParams(
            dimension_semantics=("parallel",),   # shard batch tiles across TCs
            vmem_limit_bytes=vmem_limit_bytes,
        ),
    )(x2d, w1t, b1r, w2t, b2r, gammar, betar, w3f, b3r)

    # Un-pad and Rearrange('b (m a) -> b m a', m=d_m).
    return out[:B, :D].reshape(B, d_m, d_a)


def encoder_adapter_ref(x, params, *, d_m, d_a):
    """Pure-JAX reference mirroring the PyTorch nn.Sequential exactly."""
    w1, b1, w2, b2, gamma, beta, w3, b3 = params
    B = x.shape[0]
    h = x @ w1.T + b1                                  # [B, N, C4]
    h = jnp.transpose(h, (0, 2, 1))                    # [B, C4, N]
    h = h @ w2.T + b2                                  # [B, C4, N4]
    h = jax.nn.gelu(h, approximate=False)
    mean = jnp.mean(h, axis=(1, 2), keepdims=True)
    var = jnp.mean((h - mean) ** 2, axis=(1, 2), keepdims=True)
    h = (h - mean) / jnp.sqrt(var + 1e-5) * gamma + beta
    h = h.reshape(B, -1)                               # 'b c n -> b (c n)'
    out = h @ w3.T + b3                                # [B, d_a*d_m]
    return out.reshape(B, d_m, d_a)                    # 'b (m a) -> b m a'


if __name__ == "__main__":
    # Small shapes consistent with the module's constraints
    # (embed_dim % 4 == 0, num_patches % 4 == 0); B chosen so the batch-tiled
    # grid has 2 steps (Bt = 8) — exercises the multi-step "parallel" grid.
    B, num_patches, embed_dim = 16, 16, 32
    d_a, d_m = 8, 4
    C4, N4, D = embed_dim // 4, num_patches // 4, d_a * d_m

    key = jax.random.PRNGKey(0)
    ks = jax.random.split(key, 9)
    x = jax.random.normal(ks[0], (B, num_patches, embed_dim), jnp.float32)

    # Deterministic synthetic parameters with PyTorch weight conventions.
    w1 = 0.1 * jax.random.normal(ks[1], (C4, embed_dim), jnp.float32)     # Linear(C -> C4).weight
    b1 = 0.1 * jax.random.normal(ks[2], (C4,), jnp.float32)
    w2 = 0.1 * jax.random.normal(ks[3], (N4, num_patches), jnp.float32)   # Linear(N -> N4).weight
    b2 = 0.1 * jax.random.normal(ks[4], (N4,), jnp.float32)
    gamma = 1.0 + 0.1 * jax.random.normal(ks[5], (C4, N4), jnp.float32)   # LayerNorm([C4, N4]).weight
    beta = 0.1 * jax.random.normal(ks[6], (C4, N4), jnp.float32)
    w3 = 0.1 * jax.random.normal(ks[7], (D, C4 * N4), jnp.float32)        # Linear(C4*N4 -> D).weight
    b3 = 0.1 * jax.random.normal(ks[8], (D,), jnp.float32)
    params = (w1, b1, w2, b2, gamma, beta, w3, b3)

    ref = encoder_adapter_ref(x, params, d_m=d_m, d_a=d_a)

    # Default path: bf16 streaming (MXU-native), f32 accumulation & elementwise.
    out = jax.block_until_ready(encoder_adapter(x, params, d_m=d_m, d_a=d_a))
    assert out.shape == (B, d_m, d_a), out.shape
    np.testing.assert_allclose(np.asarray(out), np.asarray(ref),
                               rtol=5e-2, atol=5e-2)

    # f32 path: exact math (only the documented associativity reorder differs).
    out_f32 = jax.block_until_ready(
        encoder_adapter(x, params, d_m=d_m, d_a=d_a,
                        compute_dtype=jnp.float32))
    np.testing.assert_allclose(np.asarray(out_f32), np.asarray(ref),
                               rtol=2e-3, atol=2e-3)

    print("KERNEL_OK")
</pallas_src>

<mosaic_0001>
module attributes {stable_mosaic.version = 11 : i64} {
  func.func @_encoder_adapter_kernel(%arg0: i32, %arg1: memref<128x32xbf16, #tpu.memory_space<vmem>>, %arg2: memref<32x8xbf16, #tpu.memory_space<vmem>>, %arg3: memref<1x8xf32, #tpu.memory_space<vmem>>, %arg4: memref<16x4xbf16, #tpu.memory_space<vmem>>, %arg5: memref<1x4xf32, #tpu.memory_space<vmem>>, %arg6: memref<8x4xf32, #tpu.memory_space<vmem>>, %arg7: memref<8x4xf32, #tpu.memory_space<vmem>>, %arg8: memref<32x128xbf16, #tpu.memory_space<vmem>>, %arg9: memref<1x128xf32, #tpu.memory_space<vmem>>, %arg10: memref<8x128xf32, #tpu.memory_space<vmem>>, %arg11: memref<8x32xf32, #tpu.memory_space<vmem>>) attributes {dimension_semantics = [#tpu.dimension_semantics<parallel>], iteration_bounds = array<i64: 2>, scalar_prefetch = 0 : i64, scratch_operands = 1 : i64, tpu.core_type = #tpu.core_type<tc>, window_params = [{transform_indices = @transform_0, window_bounds = array<i64: 128, 32>}, {pipeline_mode = #tpu.pipeline_mode<synchronous>, transform_indices = @transform_1, window_bounds = array<i64: 32, 8>}, {pipeline_mode = #tpu.pipeline_mode<synchronous>, transform_indices = @transform_2, window_bounds = array<i64: 1, 8>}, {pipeline_mode = #tpu.pipeline_mode<synchronous>, transform_indices = @transform_3, window_bounds = array<i64: 16, 4>}, {pipeline_mode = #tpu.pipeline_mode<synchronous>, transform_indices = @transform_4, window_bounds = array<i64: 1, 4>}, {pipeline_mode = #tpu.pipeline_mode<synchronous>, transform_indices = @transform_5, window_bounds = array<i64: 8, 4>}, {pipeline_mode = #tpu.pipeline_mode<synchronous>, transform_indices = @transform_6, window_bounds = array<i64: 8, 4>}, {pipeline_mode = #tpu.pipeline_mode<synchronous>, transform_indices = @transform_7, window_bounds = array<i64: 32, 128>}, {pipeline_mode = #tpu.pipeline_mode<synchronous>, transform_indices = @transform_8, window_bounds = array<i64: 1, 128>}, {transform_indices = @transform_9, window_bounds = array<i64: 8, 128>}]} {
    %c0 = arith.constant 0 : index
    %c0_0 = arith.constant 0 : index
    %0 = vector.load %arg1[%c0, %c0_0] : memref<128x32xbf16, #tpu.memory_space<vmem>>, vector<128x32xbf16>
    %c0_1 = arith.constant 0 : index
    %c0_2 = arith.constant 0 : index
    %1 = vector.load %arg2[%c0_1, %c0_2] : memref<32x8xbf16, #tpu.memory_space<vmem>>, vector<32x8xbf16>
    %cst = arith.constant dense<0.000000e+00> : vector<128x8xf32>
    %2 = tpu.matmul %0, %1, %cst {dimension_numbers = #tpu.dot_dimension_numbers<[1], [0], [0], [1], [0, 0, 1, 1], [], []>} : vector<128x32xbf16>, vector<32x8xbf16>, vector<128x8xf32> -> vector<128x8xf32>
    %c0_3 = arith.constant 0 : index
    %c0_4 = arith.constant 0 : index
    %3 = vector.load %arg3[%c0_3, %c0_4] : memref<1x8xf32, #tpu.memory_space<vmem>>, vector<1x8xf32>
    %4 = vector.broadcast %3 : vector<1x8xf32> to vector<128x8xf32>
    %5 = arith.addf %2, %4 : vector<128x8xf32>
    %6 = vector.shape_cast %5 : vector<128x8xf32> to vector<8x16x8xf32>
    %7 = tpu.transpose %6, [0, 2, 1] : vector<8x16x8xf32> -> vector<8x8x16xf32>
    %8 = vector.shape_cast %7 : vector<8x8x16xf32> to vector<64x16xf32>
    %9 = arith.truncf %8 : vector<64x16xf32> to vector<64x16xbf16>
    %c0_5 = arith.constant 0 : index
    %c0_6 = arith.constant 0 : index
    %10 = vector.load %arg4[%c0_5, %c0_6] : memref<16x4xbf16, #tpu.memory_space<vmem>>, vector<16x4xbf16>
    %cst_7 = arith.constant dense<0.000000e+00> : vector<64x4xf32>
    %11 = tpu.matmul %9, %10, %cst_7 {dimension_numbers = #tpu.dot_dimension_numbers<[1], [0], [0], [1], [0, 0, 1, 1], [], []>} : vector<64x16xbf16>, vector<16x4xbf16>, vector<64x4xf32> -> vector<64x4xf32>
    %c0_8 = arith.constant 0 : index
    %c0_9 = arith.constant 0 : index
    %12 = vector.load %arg5[%c0_8, %c0_9] : memref<1x4xf32, #tpu.memory_space<vmem>>, vector<1x4xf32>
    %13 = vector.broadcast %12 : vector<1x4xf32> to vector<64x4xf32>
    %14 = arith.addf %11, %13 : vector<64x4xf32>
    %cst_10 = arith.constant 5.000000e-01 : f32
    %15 = vector.broadcast %cst_10 : f32 to vector<64x4xf32>
    %16 = arith.mulf %15, %14 : vector<64x4xf32>
    %cst_11 = arith.constant 0.707106769 : f32
    %17 = vector.broadcast %cst_11 : f32 to vector<64x4xf32>
    %18 = arith.mulf %14, %17 : vector<64x4xf32>
    %19 = math.erf %18 : vector<64x4xf32>
    %cst_12 = arith.constant 1.000000e+00 : f32
    %20 = vector.broadcast %cst_12 : f32 to vector<64x4xf32>
    %21 = arith.addf %20, %19 : vector<64x4xf32>
    %22 = arith.mulf %16, %21 : vector<64x4xf32>
    %23 = vector.shape_cast %22 : vector<64x4xf32> to vector<8x8x4xf32>
    %cst_13 = arith.constant dense<0.000000e+00> : vector<8x8xf32>
    %24 = vector.multi_reduction <add>, %23, %cst_13 [2] : vector<8x8x4xf32> to vector<8x8xf32>
    %25 = vector.shape_cast %24 : vector<8x8xf32> to vector<8x8x1xf32>
    %cst_14 = arith.constant dense<0.000000e+00> : vector<8x1xf32>
    %26 = vector.multi_reduction <add>, %25, %cst_14 [1] : vector<8x8x1xf32> to vector<8x1xf32>
    %27 = vector.shape_cast %26 : vector<8x1xf32> to vector<8x1x1xf32>
    %28 = arith.mulf %23, %23 : vector<8x8x4xf32>
    %cst_15 = arith.constant dense<0.000000e+00> : vector<8x8xf32>
    %29 = vector.multi_reduction <add>, %28, %cst_15 [2] : vector<8x8x4xf32> to vector<8x8xf32>
    %30 = vector.shape_cast %29 : vector<8x8xf32> to vector<8x8x1xf32>
    %cst_16 = arith.constant dense<0.000000e+00> : vector<8x1xf32>
    %31 = vector.multi_reduction <add>, %30, %cst_16 [1] : vector<8x8x1xf32> to vector<8x1xf32>
    %32 = vector.shape_cast %31 : vector<8x1xf32> to vector<8x1x1xf32>
    %cst_17 = arith.constant 3.125000e-02 : f32
    %33 = vector.broadcast %cst_17 : f32 to vector<8x1x1xf32>
    %34 = arith.mulf %27, %33 : vector<8x1x1xf32>
    %cst_18 = arith.constant 3.125000e-02 : f32
    %35 = vector.broadcast %cst_18 : f32 to vector<8x1x1xf32>
    %36 = arith.mulf %32, %35 : vector<8x1x1xf32>
    %37 = arith.mulf %34, %34 : vector<8x1x1xf32>
    %38 = arith.subf %36, %37 : vector<8x1x1xf32>
    %39 = vector.broadcast %34 : vector<8x1x1xf32> to vector<8x8x4xf32>
    %40 = arith.subf %23, %39 : vector<8x8x4xf32>
    %cst_19 = arith.constant 9.99999974E-6 : f32
    %41 = vector.broadcast %cst_19 : f32 to vector<8x1x1xf32>
    %42 = arith.addf %38, %41 : vector<8x1x1xf32>
    %43 = math.rsqrt %42 : vector<8x1x1xf32>
    %44 = vector.broadcast %43 : vector<8x1x1xf32> to vector<8x8x4xf32>
    %45 = arith.mulf %40, %44 : vector<8x8x4xf32>
    %c0_20 = arith.constant 0 : index
    %c0_21 = arith.constant 0 : index
    %46 = vector.load %arg6[%c0_20, %c0_21] : memref<8x4xf32, #tpu.memory_space<vmem>>, vector<8x4xf32>
    %47 = vector.shape_cast %46 : vector<8x4xf32> to vector<1x8x4xf32>
    %48 = vector.broadcast %47 : vector<1x8x4xf32> to vector<8x8x4xf32>
    %49 = arith.mulf %45, %48 : vector<8x8x4xf32>
    %c0_22 = arith.constant 0 : index
    %c0_23 = arith.constant 0 : index
    %50 = vector.load %arg7[%c0_22, %c0_23] : memref<8x4xf32, #tpu.memory_space<vmem>>, vector<8x4xf32>
    %51 = vector.shape_cast %50 : vector<8x4xf32> to vector<1x8x4xf32>
    %52 = vector.broadcast %51 : vector<1x8x4xf32> to vector<8x8x4xf32>
    %53 = arith.addf %49, %52 : vector<8x8x4xf32>
    %54 = vector.extract_strided_slice %53 {offsets = [0, 0, 0], sizes = [8, 1, 4], strides = [1, 1, 1]} : vector<8x8x4xf32> to vector<8x1x4xf32>
    %55 = vector.shape_cast %54 : vector<8x1x4xf32> to vector<8x4xf32>
    %c0_24 = arith.constant 0 : index
    %c0_25 = arith.constant 0 : index
    %56 = vector.load %arg11[%c0_24, %c0_25] : memref<8x32xf32, #tpu.memory_space<vmem>>, vector<8x4xf32>
    tpu.vector_store %arg11[%c0_24, %c0_25], %55 {strides = array<i32>} : memref<8x32xf32, #tpu.memory_space<vmem>>, vector<8x4xf32>,
    %57 = vector.extract_strided_slice %53 {offsets = [0, 1, 0], sizes = [8, 1, 4], strides = [1, 1, 1]} : vector<8x8x4xf32> to vector<8x1x4xf32>
    %58 = vector.shape_cast %57 : vector<8x1x4xf32> to vector<8x4xf32>
    %c0_26 = arith.constant 0 : index
    %c4 = arith.constant 4 : index
    %59 = vector.load %arg11[%c0_26, %c4] : memref<8x32xf32, #tpu.memory_space<vmem>>, vector<8x4xf32>
    tpu.vector_store %arg11[%c0_26, %c4], %58 {strides = array<i32>} : memref<8x32xf32, #tpu.memory_space<vmem>>, vector<8x4xf32>,
    %60 = vector.extract_strided_slice %53 {offsets = [0, 2, 0], sizes = [8, 1, 4], strides = [1, 1, 1]} : vector<8x8x4xf32> to vector<8x1x4xf32>
    %61 = vector.shape_cast %60 : vector<8x1x4xf32> to vector<8x4xf32>
    %c0_27 = arith.constant 0 : index
    %c8 = arith.constant 8 : index
    %62 = vector.load %arg11[%c0_27, %c8] : memref<8x32xf32, #tpu.memory_space<vmem>>, vector<8x4xf32>
    tpu.vector_store %arg11[%c0_27, %c8], %61 {strides = array<i32>} : memref<8x32xf32, #tpu.memory_space<vmem>>, vector<8x4xf32>,
    %63 = vector.extract_strided_slice %53 {offsets = [0, 3, 0], sizes = [8, 1, 4], strides = [1, 1, 1]} : vector<8x8x4xf32> to vector<8x1x4xf32>
    %64 = vector.shape_cast %63 : vector<8x1x4xf32> to vector<8x4xf32>
    %c0_28 = arith.constant 0 : index
    %c12 = arith.constant 12 : index
    %65 = vector.load %arg11[%c0_28, %c12] : memref<8x32xf32, #tpu.memory_space<vmem>>, vector<8x4xf32>
    tpu.vector_store %arg11[%c0_28, %c12], %64 {strides = array<i32>} : memref<8x32xf32, #tpu.memory_space<vmem>>, vector<8x4xf32>,
    %66 = vector.extract_strided_slice %53 {offsets = [0, 4, 0], sizes = [8, 1, 4], strides = [1, 1, 1]} : vector<8x8x4xf32> to vector<8x1x4xf32>
    %67 = vector.shape_cast %66 : vector<8x1x4xf32> to vector<8x4xf32>
    %c0_29 = arith.constant 0 : index
    %c16 = arith.constant 16 : index
    %68 = vector.load %arg11[%c0_29, %c16] : memref<8x32xf32, #tpu.memory_space<vmem>>, vector<8x4xf32>
    tpu.vector_store %arg11[%c0_29, %c16], %67 {strides = array<i32>} : memref<8x32xf32, #tpu.memory_space<vmem>>, vector<8x4xf32>,
    %69 = vector.extract_strided_slice %53 {offsets = [0, 5, 0], sizes = [8, 1, 4], strides = [1, 1, 1]} : vector<8x8x4xf32> to vector<8x1x4xf32>
    %70 = vector.shape_cast %69 : vector<8x1x4xf32> to vector<8x4xf32>
    %c0_30 = arith.constant 0 : index
    %c20 = arith.constant 20 : index
    %71 = vector.load %arg11[%c0_30, %c20] : memref<8x32xf32, #tpu.memory_space<vmem>>, vector<8x4xf32>
    tpu.vector_store %arg11[%c0_30, %c20], %70 {strides = array<i32>} : memref<8x32xf32, #tpu.memory_space<vmem>>, vector<8x4xf32>,
    %72 = vector.extract_strided_slice %53 {offsets = [0, 6, 0], sizes = [8, 1, 4], strides = [1, 1, 1]} : vector<8x8x4xf32> to vector<8x1x4xf32>
    %73 = vector.shape_cast %72 : vector<8x1x4xf32> to vector<8x4xf32>
    %c0_31 = arith.constant 0 : index
    %c24 = arith.constant 24 : index
    %74 = vector.load %arg11[%c0_31, %c24] : memref<8x32xf32, #tpu.memory_space<vmem>>, vector<8x4xf32>
    tpu.vector_store %arg11[%c0_31, %c24], %73 {strides = array<i32>} : memref<8x32xf32, #tpu.memory_space<vmem>>, vector<8x4xf32>,
    %75 = vector.extract_strided_slice %53 {offsets = [0, 7, 0], sizes = [8, 1, 4], strides = [1, 1, 1]} : vector<8x8x4xf32> to vector<8x1x4xf32>
    %76 = vector.shape_cast %75 : vector<8x1x4xf32> to vector<8x4xf32>
    %c0_32 = arith.constant 0 : index
    %c28 = arith.constant 28 : index
    %77 = vector.load %arg11[%c0_32, %c28] : memref<8x32xf32, #tpu.memory_space<vmem>>, vector<8x4xf32>
    tpu.vector_store %arg11[%c0_32, %c28], %76 {strides = array<i32>} : memref<8x32xf32, #tpu.memory_space<vmem>>, vector<8x4xf32>,
    %c0_33 = arith.constant 0 : index
    %c0_34 = arith.constant 0 : index
    %78 = vector.load %arg11[%c0_33, %c0_34] : memref<8x32xf32, #tpu.memory_space<vmem>>, vector<8x32xf32>
    %79 = arith.truncf %78 : vector<8x32xf32> to vector<8x32xbf16>
    %c0_35 = arith.constant 0 : index
    %c0_36 = arith.constant 0 : index
    %80 = vector.load %arg8[%c0_35, %c0_36] : memref<32x128xbf16, #tpu.memory_space<vmem>>, vector<32x128xbf16>
    %cst_37 = arith.constant dense<0.000000e+00> : vector<8x128xf32>
    %81 = tpu.matmul %79, %80, %cst_37 {dimension_numbers = #tpu.dot_dimension_numbers<[1], [0], [0], [1], [0, 0, 1, 1], [], []>} : vector<8x32xbf16>, vector<32x128xbf16>, vector<8x128xf32> -> vector<8x128xf32>
    %c0_38 = arith.constant 0 : index
    %c0_39 = arith.constant 0 : index
    %82 = vector.load %arg9[%c0_38, %c0_39] : memref<1x128xf32, #tpu.memory_space<vmem>>, vector<1x128xf32>
    %83 = vector.broadcast %82 : vector<1x128xf32> to vector<8x128xf32>
    %84 = arith.addf %81, %83 : vector<8x128xf32>
    %c0_40 = arith.constant 0 : index
    %c0_41 = arith.constant 0 : index
    %85 = vector.load %arg10[%c0_40, %c0_41] : memref<8x128xf32, #tpu.memory_space<vmem>>, vector<8x128xf32>
    tpu.vector_store %arg10[%c0_40, %c0_41], %84 {strides = array<i32>} : memref<8x128xf32, #tpu.memory_space<vmem>>, vector<8x128xf32>,
    return
  }
  func.func @transform_0(%arg0: i32) -> (i32, i32) {
    %c0_i32 = arith.constant 0 : i32
    %c0_i32_0 = arith.constant 0 : i32
    return %arg0, %c0_i32 : i32, i32
  }
  func.func @transform_1(%arg0: i32) -> (i32, i32) {
    %c0_i32 = arith.constant 0 : i32
    %c0_i32_0 = arith.constant 0 : i32
    %c0_i32_1 = arith.constant 0 : i32
    return %c0_i32, %c0_i32_0 : i32, i32
  }
  func.func @transform_2(%arg0: i32) -> (i32, i32) {
    %c0_i32 = arith.constant 0 : i32
    %c0_i32_0 = arith.constant 0 : i32
    %c0_i32_1 = arith.constant 0 : i32
    return %c0_i32, %c0_i32_0 : i32, i32
  }
  func.func @transform_3(%arg0: i32) -> (i32, i32) {
    %c0_i32 = arith.constant 0 : i32
    %c0_i32_0 = arith.constant 0 : i32
    %c0_i32_1 = arith.constant 0 : i32
    return %c0_i32, %c0_i32_0 : i32, i32
  }
  func.func @transform_4(%arg0: i32) -> (i32, i32) {
    %c0_i32 = arith.constant 0 : i32
    %c0_i32_0 = arith.constant 0 : i32
    %c0_i32_1 = arith.constant 0 : i32
    return %c0_i32, %c0_i32_0 : i32, i32
  }
  func.func @transform_5(%arg0: i32) -> (i32, i32) {
    %c0_i32 = arith.constant 0 : i32
    %c0_i32_0 = arith.constant 0 : i32
    %c0_i32_1 = arith.constant 0 : i32
    return %c0_i32, %c0_i32_0 : i32, i32
  }
  func.func @transform_6(%arg0: i32) -> (i32, i32) {
    %c0_i32 = arith.constant 0 : i32
    %c0_i32_0 = arith.constant 0 : i32
    %c0_i32_1 = arith.constant 0 : i32
    return %c0_i32, %c0_i32_0 : i32, i32
  }
  func.func @transform_7(%arg0: i32) -> (i32, i32) {
    %c0_i32 = arith.constant 0 : i32
    %c0_i32_0 = arith.constant 0 : i32
    %c0_i32_1 = arith.constant 0 : i32
    return %c0_i32, %c0_i32_0 : i32, i32
  }
  func.func @transform_8(%arg0: i32) -> (i32, i32) {
    %c0_i32 = arith.constant 0 : i32
    %c0_i32_0 = arith.constant 0 : i32
    %c0_i32_1 = arith.constant 0 : i32
    return %c0_i32, %c0_i32_0 : i32, i32
  }
  func.func @transform_9(%arg0: i32) -> (i32, i32) {
    %c0_i32 = arith.constant 0 : i32
    %c0_i32_0 = arith.constant 0 : i32
    return %arg0, %c0_i32 : i32, i32
  }
}

</mosaic_0001>

<llo_original>
// kernel: tpu_custom_call.1
$region0: #{tpu_custom_call.1}
  #allocation0 [shape = 'u32[]', space=smem, size = 0x4, offset = 0x4, fixed_abs, tag = 'smem constant byte address 0x4 - core index']
  #allocation1 [shape = 'u32[144,128]{1,0:T(1,128)}', space=vmem, size = 0x12000, scoped, tag = 'internal scratch']
  #allocation2 [shape = 'f32[8,32]{1,0:T(8,128)}', space=vmem, size = 0x1000, scoped, tag = 'scratch operand']
  %s0 = inlined_call_operand.vmem [shape: bf16[256,32], index: 0, kind: input, shape index: {}]
  %s1 = inlined_call_operand.vmem [shape: bf16[32,8], index: 1, kind: input, shape index: {}]
  %s2 = inlined_call_operand.vmem [shape: f32[1,8], index: 2, kind: input, shape index: {}]
  %s3 = inlined_call_operand.vmem [shape: bf16[16,4], index: 3, kind: input, shape index: {}]
  %s4 = inlined_call_operand.vmem [shape: f32[1,4], index: 4, kind: input, shape index: {}]
  %s5 = inlined_call_operand.vmem [shape: f32[8,4], index: 5, kind: input, shape index: {}]
  %s6 = inlined_call_operand.vmem [shape: f32[8,4], index: 6, kind: input, shape index: {}]
  %s7 = inlined_call_operand.vmem [shape: bf16[32,128], index: 7, kind: input, shape index: {}]
  %s8 = inlined_call_operand.vmem [shape: f32[1,128], index: 8, kind: input, shape index: {}]
  %s9 = inlined_call_operand.hbm [shape: f32[16,128], index: 9, kind: output, shape index: {}]
  %s10 = sld [smem:[#allocation0]]
  $region69: #{tpu_custom_call.1} parent=0
    _
  %s12 = ssub.s32 1, %s10
  %s13 = scalar_select 0, %s12, %s10
  $region1: #{tpu_custom_call.1} parent=0
    #allocation3 [shape = 'u8[8192]{0}', space=vmem, size = 0x2000, scoped, tag = 'output window, operand 0']
    #allocation4 [shape = 's32[2]{0}', space=sflag, size = 0x8, scoped, tag = 'scoped memory for tpu_custom_call.1']
    %14 = vsyncpa [#allocation4], 0
    %s15 = scalar_lea.sflag [#allocation4], 1
    %16 = vsyncpa %s15, 0
    loop: start=0, step=1, limit=4
    $region2: #{tpu_custom_call.1} parent=1 // loop_pre_header
      _
    $region3: #{tpu_custom_call.1} parent=1 // loop_header
      %s18 = sphi 0, %s22
      %p19 = scmp.ge.s32.totalorder %s18, 4
      %s28 = sphi 0, %s30
      %s31 = sphi 0, %s28
      %s32 = sphi 0, %s31
      %s48 = sphi 0, %s32
      %s52 = sphi 0, %s52
      %s54 = sphi 0, %s52
      %s55 = sphi 0, %s54
      %s69 = sphi 0, %s55
      %s73 = sphi 0, %s73
      %s75 = sphi 0, %s73
      %s76 = sphi 0, %s75
      %s90 = sphi 0, %s76
      %s94 = sphi 0, %s94
      %s96 = sphi 0, %s94
      %s97 = sphi 0, %s96
      %s111 = sphi 0, %s97
      %s115 = sphi 0, %s115
      %s117 = sphi 0, %s115
      %s118 = sphi 0, %s117
      %s132 = sphi 0, %s118
      %s136 = sphi 0, %s136
      %s138 = sphi 0, %s136
      %s139 = sphi 0, %s138
      %s153 = sphi 0, %s139
      %s157 = sphi 0, %s157
      %s159 = sphi 0, %s157
      %s160 = sphi 0, %s159
      %s174 = sphi 0, %s160
      %s178 = sphi 0, %s178
      %s180 = sphi 0, %s178
      %s181 = sphi 0, %s180
      %s195 = sphi 0, %s181
      %s199 = sphi 0, %s199
      %s201 = sphi 0, %s199
      %s202 = sphi 0, %s201
      %s216 = sphi 0, %s202
      %s222 = sphi 0, %s224
      %s225 = sphi 0, %s222
      %s226 = sphi 0, %s225
      %s242 = sphi 0, %s226
    $region4: #{tpu_custom_call.1} parent=1 // loop_header_branch
      %21 = sbr.rel (%p19) target = $region8
    $region5: #{tpu_custom_call.1} parent=1 // loop_body
      %s23 = ssub.s32 %s18, 1
      %s24 = ssub.s32 %s18, 2
      %s25 = sadd.s32 %s18, 1
      %s26 = ssub.s32 %s18, %s25
      %p27 = scmp.eq.s32.totalorder %s26, 0
      %s29 = sadd.s32 %s28, 1
      %s30 = scalar_select %p27, %s28, %s29
      %p33 = pneg %p27
      %p34 = scmp.eq.s32.totalorder %s18, 1
      %p35 = por %p33, %p34
      %p36 = scmp.ne.s32.totalorder %s28, %s31
      %p37 = scmp.eq.s32.totalorder %s18, 0
      %p38 = por %p36, %p37
      %p39 = scmp.ne.s32.totalorder %s28, %s31
      %p40 = scmp.eq.s32.totalorder %s23, 1
      %p41 = por %p39, %p40
      %p42 = scmp.ne.s32.totalorder %s31, %s32
      %p43 = scmp.eq.s32.totalorder %s23, 0
      %p44 = por %p42, %p43
      %p45 = scmp.ne.s32.totalorder %s31, %s32
      %p46 = scmp.eq.s32.totalorder %s24, 1
      %p47 = por %p45, %p46
      %p49 = scmp.ne.s32.totalorder %s32, %s48
      %p50 = scmp.eq.s32.totalorder %s24, 0
      %p51 = por %p49, %p50
      %s53 = sadd.s32 %s52, 1
      %p56 = scmp.eq.s32.totalorder %s18, 1
      %p57 = scmp.ne.s32.totalorder %s52, %s54
      %p58 = scmp.eq.s32.totalorder %s18, 0
      %p59 = por %p57, %p58
      %p60 = scmp.ne.s32.totalorder %s52, %s54
      %p61 = scmp.eq.s32.totalorder %s23, 1
      %p62 = por %p60, %p61
      %p63 = scmp.ne.s32.totalorder %s54, %s55
      %p64 = scmp.eq.s32.totalorder %s23, 0
      %p65 = por %p63, %p64
      %p66 = scmp.ne.s32.totalorder %s54, %s55
      %p67 = scmp.eq.s32.totalorder %s24, 1
      %p68 = por %p66, %p67
      %p70 = scmp.ne.s32.totalorder %s55, %s69
      %p71 = scmp.eq.s32.totalorder %s24, 0
      %p72 = por %p70, %p71
      %s74 = sadd.s32 %s73, 1
      %p77 = scmp.eq.s32.totalorder %s18, 1
      %p78 = scmp.ne.s32.totalorder %s73, %s75
      %p79 = scmp.eq.s32.totalorder %s18, 0
      %p80 = por %p78, %p79
      %p81 = scmp.ne.s32.totalorder %s73, %s75
      %p82 = scmp.eq.s32.totalorder %s23, 1
      %p83 = por %p81, %p82
      %p84 = scmp.ne.s32.totalorder %s75, %s76
      %p85 = scmp.eq.s32.totalorder %s23, 0
      %p86 = por %p84, %p85
      %p87 = scmp.ne.s32.totalorder %s75, %s76
      %p88 = scmp.eq.s32.totalorder %s24, 1
      %p89 = por %p87, %p88
      %p91 = scmp.ne.s32.totalorder %s76, %s90
      %p92 = scmp.eq.s32.totalorder %s24, 0
      %p93 = por %p91, %p92
      %s95 = sadd.s32 %s94, 1
      %p98 = scmp.eq.s32.totalorder %s18, 1
      %p99 = scmp.ne.s32.totalorder %s94, %s96
      %p100 = scmp.eq.s32.totalorder %s18, 0
      %p101 = por %p99, %p100
      %p102 = scmp.ne.s32.totalorder %s94, %s96
      %p103 = scmp.eq.s32.totalorder %s23, 1
      %p104 = por %p102, %p103
      %p105 = scmp.ne.s32.totalorder %s96, %s97
      %p106 = scmp.eq.s32.totalorder %s23, 0
      %p107 = por %p105, %p106
      %p108 = scmp.ne.s32.totalorder %s96, %s97
      %p109 = scmp.eq.s32.totalorder %s24, 1
      %p110 = por %p108, %p109
      %p112 = scmp.ne.s32.totalorder %s97, %s111
      %p113 = scmp.eq.s32.totalorder %s24, 0
      %p114 = por %p112, %p113
      %s116 = sadd.s32 %s115, 1
      %p119 = scmp.eq.s32.totalorder %s18, 1
      %p120 = scmp.ne.s32.totalorder %s115, %s117
      %p121 = scmp.eq.s32.totalorder %s18, 0
      %p122 = por %p120, %p121
      %p123 = scmp.ne.s32.totalorder %s115, %s117
      %p124 = scmp.eq.s32.totalorder %s23, 1
      %p125 = por %p123, %p124
      %p126 = scmp.ne.s32.totalorder %s117, %s118
      %p127 = scmp.eq.s32.totalorder %s23, 0
      %p128 = por %p126, %p127
      %p129 = scmp.ne.s32.totalorder %s117, %s118
      %p130 = scmp.eq.s32.totalorder %s24, 1
      %p131 = por %p129, %p130
      %p133 = scmp.ne.s32.totalorder %s118, %s132
      %p134 = scmp.eq.s32.totalorder %s24, 0
      %p135 = por %p133, %p134
      %s137 = sadd.s32 %s136, 1
      %p140 = scmp.eq.s32.totalorder %s18, 1
      %p141 = scmp.ne.s32.totalorder %s136, %s138
      %p142 = scmp.eq.s32.totalorder %s18, 0
      %p143 = por %p141, %p142
      %p144 = scmp.ne.s32.totalorder %s136, %s138
      %p145 = scmp.eq.s32.totalorder %s23, 1
      %p146 = por %p144, %p145
      %p147 = scmp.ne.s32.totalorder %s138, %s139
      %p148 = scmp.eq.s32.totalorder %s23, 0
      %p149 = por %p147, %p148
      %p150 = scmp.ne.s32.totalorder %s138, %s139
      %p151 = scmp.eq.s32.totalorder %s24, 1
      %p152 = por %p150, %p151
      %p154 = scmp.ne.s32.totalorder %s139, %s153
      %p155 = scmp.eq.s32.totalorder %s24, 0
      %p156 = por %p154, %p155
      %s158 = sadd.s32 %s157, 1
      %p161 = scmp.eq.s32.totalorder %s18, 1
      %p162 = scmp.ne.s32.totalorder %s157, %s159
      %p163 = scmp.eq.s32.totalorder %s18, 0
      %p164 = por %p162, %p163
      %p165 = scmp.ne.s32.totalorder %s157, %s159
      %p166 = scmp.eq.s32.totalorder %s23, 1
      %p167 = por %p165, %p166
      %p168 = scmp.ne.s32.totalorder %s159, %s160
      %p169 = scmp.eq.s32.totalorder %s23, 0
      %p170 = por %p168, %p169
      %p171 = scmp.ne.s32.totalorder %s159, %s160
      %p172 = scmp.eq.s32.totalorder %s24, 1
      %p173 = por %p171, %p172
      %p175 = scmp.ne.s32.totalorder %s160, %s174
      %p176 = scmp.eq.s32.totalorder %s24, 0
      %p177 = por %p175, %p176
      %s179 = sadd.s32 %s178, 1
      %p182 = scmp.eq.s32.totalorder %s18, 1
      %p183 = scmp.ne.s32.totalorder %s178, %s180
      %p184 = scmp.eq.s32.totalorder %s18, 0
      %p185 = por %p183, %p184
      %p186 = scmp.ne.s32.totalorder %s178, %s180
      %p187 = scmp.eq.s32.totalorder %s23, 1
      %p188 = por %p186, %p187
      %p189 = scmp.ne.s32.totalorder %s180, %s181
      %p190 = scmp.eq.s32.totalorder %s23, 0
      %p191 = por %p189, %p190
      %p192 = scmp.ne.s32.totalorder %s180, %s181
      %p193 = scmp.eq.s32.totalorder %s24, 1
      %p194 = por %p192, %p193
      %p196 = scmp.ne.s32.totalorder %s181, %s195
      %p197 = scmp.eq.s32.totalorder %s24, 0
      %p198 = por %p196, %p197
      %s200 = sadd.s32 %s199, 1
      %p203 = scmp.eq.s32.totalorder %s18, 1
      %p204 = scmp.ne.s32.totalorder %s199, %s201
      %p205 = scmp.eq.s32.totalorder %s18, 0
      %p206 = por %p204, %p205
      %p207 = scmp.ne.s32.totalorder %s199, %s201
      %p208 = scmp.eq.s32.totalorder %s23, 1
      %p209 = por %p207, %p208
      %p210 = scmp.ne.s32.totalorder %s201, %s202
      %p211 = scmp.eq.s32.totalorder %s23, 0
      %p212 = por %p210, %p211
      %p213 = scmp.ne.s32.totalorder %s201, %s202
      %p214 = scmp.eq.s32.totalorder %s24, 1
      %p215 = por %p213, %p214
      %p217 = scmp.ne.s32.totalorder %s202, %s216
      %p218 = scmp.eq.s32.totalorder %s24, 0
      %p219 = por %p217, %p218
      %s220 = ssub.s32 %s18, %s25
      %p221 = scmp.eq.s32.totalorder %s220, 0
      %s223 = sadd.s32 %s222, 1
      %s224 = scalar_select %p221, %s222, %s223
      %p227 = pneg %p221
      %p228 = scmp.eq.s32.totalorder %s18, 1
      %p229 = por %p227, %p228
      %p230 = scmp.ne.s32.totalorder %s222, %s225
      %p231 = scmp.eq.s32.totalorder %s18, 0
      %p232 = por %p230, %p231
      %p233 = scmp.ne.s32.totalorder %s222, %s225
      %p234 = scmp.eq.s32.totalorder %s23, 1
      %p235 = por %p233, %p234
      %p236 = scmp.ne.s32.totalorder %s225, %s226
      %p237 = scmp.eq.s32.totalorder %s23, 0
      %p238 = por %p236, %p237
      %p239 = scmp.ne.s32.totalorder %s225, %s226
      %p240 = scmp.eq.s32.totalorder %s24, 1
      %p241 = por %p239, %p240
      %p243 = scmp.ne.s32.totalorder %s226, %s242
      %p244 = scmp.eq.s32.totalorder %s24, 0
      %p245 = por %p243, %p244
      %p246 = scmp.le.s32.totalorder 1, %s18
      %p247 = scmp.lt.s32.totalorder %s18, 3
      %p248 = pnand %p246, %p247
      %p249 = pneg %p248
      // Predicated region
      $region9: #{tpu_custom_call.1} parent=5 // pred_check
        _
      $region10: #{tpu_custom_call.1} parent=5 // pred_check_branch
        %251 = sbr.rel (%p248) target = $region12
      $region11: #{tpu_custom_call.1} parent=5 // pred_region
        %s252 = ssub.s32 %s18, 1
        // Predicated region
        $region13: #{tpu_custom_call.1} parent=11 // pred_check
          %p253 = pneg %p65
        $region14: #{tpu_custom_call.1} parent=11 // pred_check_branch
          %255 = sbr.rel (%p253) target = $region16
        $region15: #{tpu_custom_call.1} parent=11 // pred_region
          _
        $region16: #{tpu_custom_call.1} parent=11 // pred_fallthru
          _
        // Predicated region
        $region17: #{tpu_custom_call.1} parent=11 // pred_check
          %p256 = pneg %p86
        $region18: #{tpu_custom_call.1} parent=11 // pred_check_branch
          %258 = sbr.rel (%p256) target = $region20
        $region19: #{tpu_custom_call.1} parent=11 // pred_region
          _
        $region20: #{tpu_custom_call.1} parent=11 // pred_fallthru
          _
        // Predicated region
        $region21: #{tpu_custom_call.1} parent=11 // pred_check
          %p259 = pneg %p107
        $region22: #{tpu_custom_call.1} parent=11 // pred_check_branch
          %261 = sbr.rel (%p259) target = $region24
        $region23: #{tpu_custom_call.1} parent=11 // pred_region
          _
        $region24: #{tpu_custom_call.1} parent=11 // pred_fallthru
          _
        // Predicated region
        $region25: #{tpu_custom_call.1} parent=11 // pred_check
          %p262 = pneg %p128
        $region26: #{tpu_custom_call.1} parent=11 // pred_check_branch
          %264 = sbr.rel (%p262) target = $region28
        $region27: #{tpu_custom_call.1} parent=11 // pred_region
          _
        $region28: #{tpu_custom_call.1} parent=11 // pred_fallthru
          _
        // Predicated region
        $region29: #{tpu_custom_call.1} parent=11 // pred_check
          %p265 = pneg %p149
        $region30: #{tpu_custom_call.1} parent=11 // pred_check_branch
          %267 = sbr.rel (%p265) target = $region32
        $region31: #{tpu_custom_call.1} parent=11 // pred_region
          _
        $region32: #{tpu_custom_call.1} parent=11 // pred_fallthru
          _
        // Predicated region
        $region33: #{tpu_custom_call.1} parent=11 // pred_check
          %p268 = pneg %p170
        $region34: #{tpu_custom_call.1} parent=11 // pred_check_branch
          %270 = sbr.rel (%p268) target = $region36
        $region35: #{tpu_custom_call.1} parent=11 // pred_region
          _
        $region36: #{tpu_custom_call.1} parent=11 // pred_fallthru
          _
        // Predicated region
        $region37: #{tpu_custom_call.1} parent=11 // pred_check
          %p271 = pneg %p191
        $region38: #{tpu_custom_call.1} parent=11 // pred_check_branch
          %273 = sbr.rel (%p271) target = $region40
        $region39: #{tpu_custom_call.1} parent=11 // pred_region
          _
        $region40: #{tpu_custom_call.1} parent=11 // pred_fallthru
          _
        // Predicated region
        $region41: #{tpu_custom_call.1} parent=11 // pred_check
          %p274 = pneg %p212
        $region42: #{tpu_custom_call.1} parent=11 // pred_check_branch
          %276 = sbr.rel (%p274) target = $region44
        $region43: #{tpu_custom_call.1} parent=11 // pred_region
          _
        $region44: #{tpu_custom_call.1} parent=11 // pred_fallthru
          _
      $region12: #{tpu_custom_call.1} parent=5 // pred_fallthru
        _
      %p277 = scmp.lt.s32.totalorder %s18, 2
      // Predicated region
      $region45: #{tpu_custom_call.1} parent=5 // pred_check
        %p278 = pneg %p277
      $region46: #{tpu_custom_call.1} parent=5 // pred_check_branch
        %280 = sbr.rel (%p278) target = $region48
      $region47: #{tpu_custom_call.1} parent=5 // pred_region
        // Predicated region
        $region49: #{tpu_custom_call.1} parent=47 // pred_check
          %p281 = pneg %p38
        $region50: #{tpu_custom_call.1} parent=47 // pred_check_branch
          %283 = sbr.rel (%p281) target = $region52
        $region51: #{tpu_custom_call.1} parent=47 // pred_region
          %s284 = smul.u32 16, %s18
          %p285 = scmp.lt.s32.totalorder %s284, 31
          %s286 = scalar_select %p285, %s284, 31
          %s287 = smul.addr %s286, 4
          %s288 = scalar_lea.vmem %s0, %s287
          %s289 = smul.u32 16, %s18
        $region52: #{tpu_custom_call.1} parent=47 // pred_fallthru
          _
      $region48: #{tpu_custom_call.1} parent=5 // pred_fallthru
        _
      %p290 = scmp.le.s32.totalorder 1, %s18
      %p291 = scmp.lt.s32.totalorder %s18, 3
      %p292 = pnand %p290, %p291
      %p293 = pneg %p292
      // Predicated region
      $region53: #{tpu_custom_call.1} parent=5 // pred_check
        _
      $region54: #{tpu_custom_call.1} parent=5 // pred_check_branch
        %295 = sbr.rel (%p292) target = $region56
      $region55: #{tpu_custom_call.1} parent=5 // pred_region
        %s296 = ssub.s32 %s18, 1
        %s297 = smul.u32 16, %s23
        %p298 = scmp.lt.s32.totalorder %s297, 31
        %s299 = scalar_select %p298, %s297, 31
        %s300 = smul.addr %s299, 4
        %s301 = scalar_lea.vmem %s0, %s300
        %p302 = pneg %p44
        %p303 = pneg %p41
        %p304 = pneg %p65
        %p305 = pneg %p62
        %p306 = pneg %p86
        %p307 = pneg %p83
        %p308 = pneg %p107
        %p309 = pneg %p104
        %p310 = pneg %p128
        %p311 = pneg %p125
        %p312 = pneg %p149
        %p313 = pneg %p146
        %p314 = pneg %p170
        %p315 = pneg %p167
        %p316 = pneg %p191
        %p317 = pneg %p188
        %p318 = pneg %p212
        %p319 = pneg %p209
        %p320 = pneg %p238
        %p321 = pneg %p235
        %s322 = sand.u32 %s225, 1
        %s323 = scalar_lea.sflag [#allocation4], %s322
        %s324 = sand.u32 %s225, 1
        %s325 = smul.addr %s324, 8
        %s326 = scalar_lea.vmem [#allocation3], %s325
        %s327 = smul.u32 16, %s23
        %p328 = scmp.lt.s32.totalorder %s327, 31
        %s329 = scalar_select %p328, %s327, 31
        %s330 = smul.addr %s329, 4
        %s331 = scalar_lea.vmem %s0, %s330
        %s332 = smul.u32 16, %s23
        %v334 = vld [vmem:[%s331] sm:$0xf]
        %v335 = vld [vmem:[%s331 + $0x4] sm:$0xf]
        %v336 = vld [vmem:[%s331 + $0x8] sm:$0xf]
        %v337 = vld [vmem:[%s331 + $0xc] sm:$0xf]
        %v338 = vld [vmem:[%s331 + $0x10] sm:$0xf]
        %v339 = vld [vmem:[%s331 + $0x14] sm:$0xf]
        %v340 = vld [vmem:[%s331 + $0x18] sm:$0xf]
        %v341 = vld [vmem:[%s331 + $0x1c] sm:$0xf]
        %v342 = vld [vmem:[%s331 + $0x20] sm:$0xf]
        %v343 = vld [vmem:[%s331 + $0x24] sm:$0xf]
        %v344 = vld [vmem:[%s331 + $0x28] sm:$0xf]
        %v345 = vld [vmem:[%s331 + $0x2c] sm:$0xf]
        %v346 = vld [vmem:[%s331 + $0x30] sm:$0xf]
        %v347 = vld [vmem:[%s331 + $0x34] sm:$0xf]
        %v348 = vld [vmem:[%s331 + $0x38] sm:$0xf]
        %v349 = vld [vmem:[%s331 + $0x3c] sm:$0xf]
        %v350 = vld [vmem:[%s1] sm:$0xf]
        %v351 = vld [vmem:[%s1 + $0x4] sm:$0xf]
        %v352 = vld [vmem:[%s1 + $0x8] sm:$0xf]
        %v353 = vld [vmem:[%s1 + $0xc] sm:$0xf]
        %v354 = vld [vmem:[%s2] sm:$0x1]
        %v356 = vlaneseq
        %v357 = vshrl.u32 %v356, 7
        %v358 = vsub.s32 0, %v357
        %v359 = vrot.slane %v354, %v358
        %v377 = vunpack.c.l.b16 %v334
        %v378 = vunpack.c.l.b16 %v335
        %v379 = vunpack.c.l.b16 %v336
        %v380 = vunpack.c.l.b16 %v337
        %v381 = vunpack.c.l.b16 %v338
        %v382 = vunpack.c.l.b16 %v339
        %v383 = vunpack.c.l.b16 %v340
        %v384 = vunpack.c.l.b16 %v341
        %v385 = vunpack.c.l.b16 %v342
        %v386 = vunpack.c.l.b16 %v343
        %v387 = vunpack.c.l.b16 %v344
        %v388 = vunpack.c.l.b16 %v345
        %v389 = vunpack.c.l.b16 %v346
        %v390 = vunpack.c.l.b16 %v347
        %v391 = vunpack.c.l.b16 %v348
        %v392 = vunpack.c.l.b16 %v349
        %v393 = vpack.c.b16 %v378, %v377
        %v394 = vpack.c.b16 %v380, %v379
        %v395 = vpack.c.b16 %v382, %v381
        %v396 = vpack.c.b16 %v384, %v383
        %v397 = vpack.c.b16 %v386, %v385
        %v398 = vpack.c.b16 %v388, %v387
        %v399 = vpack.c.b16 %v390, %v389
        %v400 = vpack.c.b16 %v392, %v391
        %v405 = vunpack.c.l.b16 %v350
        %v406 = vunpack.c.l.b16 %v351
        %v407 = vunpack.c.l.b16 %v352
        %v408 = vunpack.c.l.b16 %v353
        %v409 = vpack.c.b16 %v406, %v405
        %v410 = vpack.c.b16 %v408, %v407
        %vm413 = vcmask 261120
        %v415 = vsel %vm413, %v393, 0
        %v418 = vsel %vm413, %v394, 0
        %v421 = vsel %vm413, %v395, 0
        %v424 = vsel %vm413, %v396, 0
        %v427 = vsel %vm413, %v397, 0
        %v430 = vsel %vm413, %v398, 0
        %v433 = vsel %vm413, %v399, 0
        %v436 = vsel %vm413, %v400, 0
        %438 = vmatprep.subr.bf16.mxu0 0
        %439 = vmatpush1.bf16.msra.mxu0 %v409
        %440 = vmatprep.subr.bf16.mxu0 0
        %441 = vmatpush1.bf16.msra.mxu0 %v410
        %442 = vmatprep.subr.bf16.mxu0 0
        %443 = vmatpush1.bf16.msra.mxu0 0
        %444 = vmatprep.subr.bf16.mxu0 0
        %445 = vmatpush1.bf16.msra.mxu0 0
        %446 = vmatprep.subr.bf16.mxu0 0
        %447 = vmatpush1.bf16.msra.mxu0 0
        %448 = vmatprep.subr.bf16.mxu0 0
        %449 = vmatpush1.bf16.msra.mxu0 0
        %450 = vmatprep.subr.bf16.mxu0 0
        %451 = vmatpush1.bf16.msra.mxu0 0
        %452 = vmatprep.subr.bf16.mxu0 0
        %453 = vmatpush1.bf16.msra.mxu0 0
        %454 = vmatprep.subr.bf16.mxu0 0
        %455 = vmatpush1.bf16.msra.mxu0 0
        %456 = vmatprep.subr.bf16.mxu0 0
        %457 = vmatpush1.bf16.msra.mxu0 0
        %458 = vmatprep.subr.bf16.mxu0 0
        %459 = vmatpush1.bf16.msra.mxu0 0
        %460 = vmatprep.subr.bf16.mxu0 0
        %461 = vmatpush1.bf16.msra.mxu0 0
        %462 = vmatprep.subr.bf16.mxu0 0
        %463 = vmatpush1.bf16.msra.mxu0 0
        %464 = vmatprep.subr.bf16.mxu0 0
        %465 = vmatpush1.bf16.msra.mxu0 0
        %466 = vmatprep.subr.bf16.mxu0 0
        %467 = vmatpush1.bf16.msra.mxu0 0
        %468 = vmatprep.subr.bf16.mxu0 0
        %469 = vmatpush1.bf16.msra.mxu0 0
        %470 = vmatprep.mubr.bf16.mxu0 0
        %471 = vmatmul.mubr.bf16.gmra.mrb[0].mxu0 %v415
        %v472 = vpop.f32.mrb[0].mxu0
        %v473 = vadd.f32 %v359, %v472
        %v474 = vpop.f32.mrb[0].mxu0
        %v475 = vpop.f32.mrb[0].mxu0
        %v476 = vadd.f32 %v359, %v475
        %v477 = vpop.f32.mrb[0].mxu0
        %478 = vmatprep.mubr.bf16.mxu0 0
        %479 = vmatmul.mubr.bf16.gmra.mrb[0].mxu0 %v418
        %v480 = vpop.f32.mrb[0].mxu0
        %v481 = vadd.f32 %v359, %v480
        %v482 = vpop.f32.mrb[0].mxu0
        %v483 = vpop.f32.mrb[0].mxu0
        %v484 = vadd.f32 %v359, %v483
        %v485 = vpop.f32.mrb[0].mxu0
        %486 = vmatprep.mubr.bf16.mxu0 0
        %487 = vmatmul.mubr.bf16.gmra.mrb[0].mxu0 %v421
        %v488 = vpop.f32.mrb[0].mxu0
        %v489 = vadd.f32 %v359, %v488
        %v490 = vpop.f32.mrb[0].mxu0
        %v491 = vpop.f32.mrb[0].mxu0
        %v492 = vadd.f32 %v359, %v491
        %v493 = vpop.f32.mrb[0].mxu0
        %494 = vmatprep.mubr.bf16.mxu0 0
        %495 = vmatmul.mubr.bf16.gmra.mrb[0].mxu0 %v424
        %v496 = vpop.f32.mrb[0].mxu0
        %v497 = vadd.f32 %v359, %v496
        %v498 = vpop.f32.mrb[0].mxu0
        %v499 = vpop.f32.mrb[0].mxu0
        %v500 = vadd.f32 %v359, %v499
        %v501 = vpop.f32.mrb[0].mxu0
        %502 = vmatprep.mubr.bf16.mxu0 0
        %503 = vmatmul.mubr.bf16.gmra.mrb[0].mxu0 %v427
        %v504 = vpop.f32.mrb[0].mxu0
        %v505 = vadd.f32 %v359, %v504
        %v506 = vpop.f32.mrb[0].mxu0
        %v507 = vpop.f32.mrb[0].mxu0
        %v508 = vadd.f32 %v359, %v507
        %v509 = vpop.f32.mrb[0].mxu0
        %510 = vmatprep.mubr.bf16.mxu0 0
        %511 = vmatmul.mubr.bf16.gmra.mrb[0].mxu0 %v430
        %v512 = vpop.f32.mrb[0].mxu0
        %v513 = vadd.f32 %v359, %v512
        %v514 = vpop.f32.mrb[0].mxu0
        %v515 = vpop.f32.mrb[0].mxu0
        %v516 = vadd.f32 %v359, %v515
        %v517 = vpop.f32.mrb[0].mxu0
        %518 = vmatprep.mubr.bf16.mxu0 0
        %519 = vmatmul.mubr.bf16.gmra.mrb[0].mxu0 %v433
        %v520 = vpop.f32.mrb[0].mxu0
        %v521 = vadd.f32 %v359, %v520
        %v522 = vpop.f32.mrb[0].mxu0
        %v523 = vpop.f32.mrb[0].mxu0
        %v524 = vadd.f32 %v359, %v523
        %v525 = vpop.f32.mrb[0].mxu0
        %526 = vmatprep.mubr.bf16.mxu0 0
        %527 = vmatmul.mubr.bf16.gmra.mrb[0].mxu0 %v436
        %v528 = vpop.f32.mrb[0].mxu0
        %v529 = vadd.f32 %v359, %v528
        %v530 = vpop.f32.mrb[0].mxu0
        %v531 = vpop.f32.mrb[0].mxu0
        %v532 = vadd.f32 %v359, %v531
        %v533 = vpop.f32.mrb[0].mxu0
        %534 = vdwg.mxu0
        %535 = vxpose.xlu0.b32.start [1/16] %v473, 128
        %536 = vxpose.xlu0.b32.cont [2/16] %v476, 128
        %537 = vxpose.xlu0.b32.cont [3/16] 0.0, 128
        %538 = vxpose.xlu0.b32.cont [4/16] 0.0, 128
        %539 = vxpose.xlu0.b32.cont [5/16] 0.0, 128
        %540 = vxpose.xlu0.b32.cont [6/16] 0.0, 128
        %541 = vxpose.xlu0.b32.cont [7/16] 0.0, 128
        %542 = vxpose.xlu0.b32.cont [8/16] 0.0, 128
        %543 = vxpose.xlu0.b32.cont [9/16] 0.0, 128
        %544 = vxpose.xlu0.b32.cont [10/16] 0.0, 128
        %545 = vxpose.xlu0.b32.cont [11/16] 0.0, 128
        %546 = vxpose.xlu0.b32.cont [12/16] 0.0, 128
        %547 = vxpose.xlu0.b32.cont [13/16] 0.0, 128
        %548 = vxpose.xlu0.b32.cont [14/16] 0.0, 128
        %549 = vxpose.xlu0.b32.cont [15/16] 0.0, 128
        %550 = vxpose.xlu0.b32.end [16/16] 0.0, 128
        %v551 = vpop.trf.xlu0
        %v552 = vpop.trf.xlu0
        %v553 = vpop.trf.xlu0
        %v554 = vpop.trf.xlu0
        %v555 = vpop.trf.xlu0
        %v556 = vpop.trf.xlu0
        %v557 = vpop.trf.xlu0
        %v558 = vpop.trf.xlu0
        %v559 = vpop.trf.xlu0
        %v560 = vpop.trf.xlu0
        %v561 = vpop.trf.xlu0
        %v562 = vpop.trf.xlu0
        %v563 = vpop.trf.xlu0
        %v564 = vpop.trf.xlu0
        %v565 = vpop.trf.xlu0
        %v566 = vpop.trf.xlu0
        %567 = vxpose.xlu0.b32.start [1/16] %v481, 128
        %568 = vxpose.xlu0.b32.cont [2/16] %v484, 128
        %569 = vxpose.xlu0.b32.cont [3/16] 0.0, 128
        %570 = vxpose.xlu0.b32.cont [4/16] 0.0, 128
        %571 = vxpose.xlu0.b32.cont [5/16] 0.0, 128
        %572 = vxpose.xlu0.b32.cont [6/16] 0.0, 128
        %573 = vxpose.xlu0.b32.cont [7/16] 0.0, 128
        %574 = vxpose.xlu0.b32.cont [8/16] 0.0, 128
        %575 = vxpose.xlu0.b32.cont [9/16] 0.0, 128
        %576 = vxpose.xlu0.b32.cont [10/16] 0.0, 128
        %577 = vxpose.xlu0.b32.cont [11/16] 0.0, 128
        %578 = vxpose.xlu0.b32.cont [12/16] 0.0, 128
        %579 = vxpose.xlu0.b32.cont [13/16] 0.0, 128
        %580 = vxpose.xlu0.b32.cont [14/16] 0.0, 128
        %581 = vxpose.xlu0.b32.cont [15/16] 0.0, 128
        %582 = vxpose.xlu0.b32.end [16/16] 0.0, 128
        %v583 = vpop.trf.xlu0
        %v584 = vpop.trf.xlu0
        %v585 = vpop.trf.xlu0
        %v586 = vpop.trf.xlu0
        %v587 = vpop.trf.xlu0
        %v588 = vpop.trf.xlu0
        %v589 = vpop.trf.xlu0
        %v590 = vpop.trf.xlu0
        %v591 = vpop.trf.xlu0
        %v592 = vpop.trf.xlu0
        %v593 = vpop.trf.xlu0
        %v594 = vpop.trf.xlu0
        %v595 = vpop.trf.xlu0
        %v596 = vpop.trf.xlu0
        %v597 = vpop.trf.xlu0
        %v598 = vpop.trf.xlu0
        %599 = vxpose.xlu0.b32.start [1/16] %v489, 128
        %600 = vxpose.xlu0.b32.cont [2/16] %v492, 128
        %601 = vxpose.xlu0.b32.cont [3/16] 0.0, 128
        %602 = vxpose.xlu0.b32.cont [4/16] 0.0, 128
        %603 = vxpose.xlu0.b32.cont [5/16] 0.0, 128
        %604 = vxpose.xlu0.b32.cont [6/16] 0.0, 128
        %605 = vxpose.xlu0.b32.cont [7/16] 0.0, 128
        %606 = vxpose.xlu0.b32.cont [8/16] 0.0, 128
        %607 = vxpose.xlu0.b32.cont [9/16] 0.0, 128
        %608 = vxpose.xlu0.b32.cont [10/16] 0.0, 128
        %609 = vxpose.xlu0.b32.cont [11/16] 0.0, 128
        %610 = vxpose.xlu0.b32.cont [12/16] 0.0, 128
        %611 = vxpose.xlu0.b32.cont [13/16] 0.0, 128
        %612 = vxpose.xlu0.b32.cont [14/16] 0.0, 128
        %613 = vxpose.xlu0.b32.cont [15/16] 0.0, 128
        %614 = vxpose.xlu0.b32.end [16/16] 0.0, 128
        %v615 = vpop.trf.xlu0
        %v616 = vpop.trf.xlu0
        %v617 = vpop.trf.xlu0
        %v618 = vpop.trf.xlu0
        %v619 = vpop.trf.xlu0
        %v620 = vpop.trf.xlu0
        %v621 = vpop.trf.xlu0
        %v622 = vpop.trf.xlu0
        %v623 = vpop.trf.xlu0
        %v624 = vpop.trf.xlu0
        %v625 = vpop.trf.xlu0
        %v626 = vpop.trf.xlu0
        %v627 = vpop.trf.xlu0
        %v628 = vpop.trf.xlu0
        %v629 = vpop.trf.xlu0
        %v630 = vpop.trf.xlu0
        %631 = vxpose.xlu0.b32.start [1/16] %v497, 128
        %632 = vxpose.xlu0.b32.cont [2/16] %v500, 128
        %633 = vxpose.xlu0.b32.cont [3/16] 0.0, 128
        %634 = vxpose.xlu0.b32.cont [4/16] 0.0, 128
        %635 = vxpose.xlu0.b32.cont [5/16] 0.0, 128
        %636 = vxpose.xlu0.b32.cont [6/16] 0.0, 128
        %637 = vxpose.xlu0.b32.cont [7/16] 0.0, 128
        %638 = vxpose.xlu0.b32.cont [8/16] 0.0, 128
        %639 = vxpose.xlu0.b32.cont [9/16] 0.0, 128
        %640 = vxpose.xlu0.b32.cont [10/16] 0.0, 128
        %641 = vxpose.xlu0.b32.cont [11/16] 0.0, 128
        %642 = vxpose.xlu0.b32.cont [12/16] 0.0, 128
        %643 = vxpose.xlu0.b32.cont [13/16] 0.0, 128
        %644 = vxpose.xlu0.b32.cont [14/16] 0.0, 128
        %645 = vxpose.xlu0.b32.cont [15/16] 0.0, 128
        %646 = vxpose.xlu0.b32.end [16/16] 0.0, 128
        %v647 = vpop.trf.xlu0
        %v648 = vpop.trf.xlu0
        %v649 = vpop.trf.xlu0
        %v650 = vpop.trf.xlu0
        %v651 = vpop.trf.xlu0
        %v652 = vpop.trf.xlu0
        %v653 = vpop.trf.xlu0
        %v654 = vpop.trf.xlu0
        %v655 = vpop.trf.xlu0
        %v656 = vpop.trf.xlu0
        %v657 = vpop.trf.xlu0
        %v658 = vpop.trf.xlu0
        %v659 = vpop.trf.xlu0
        %v660 = vpop.trf.xlu0
        %v661 = vpop.trf.xlu0
        %v662 = vpop.trf.xlu0
        %663 = vxpose.xlu0.b32.start [1/16] %v505, 128
        %664 = vxpose.xlu0.b32.cont [2/16] %v508, 128
        %665 = vxpose.xlu0.b32.cont [3/16] 0.0, 128
        %666 = vxpose.xlu0.b32.cont [4/16] 0.0, 128
        %667 = vxpose.xlu0.b32.cont [5/16] 0.0, 128
        %668 = vxpose.xlu0.b32.cont [6/16] 0.0, 128
        %669 = vxpose.xlu0.b32.cont [7/16] 0.0, 128
        %670 = vxpose.xlu0.b32.cont [8/16] 0.0, 128
        %671 = vxpose.xlu0.b32.cont [9/16] 0.0, 128
        %672 = vxpose.xlu0.b32.cont [10/16] 0.0, 128
        %673 = vxpose.xlu0.b32.cont [11/16] 0.0, 128
        %674 = vxpose.xlu0.b32.cont [12/16] 0.0, 128
        %675 = vxpose.xlu0.b32.cont [13/16] 0.0, 128
        %676 = vxpose.xlu0.b32.cont [14/16] 0.0, 128
        %677 = vxpose.xlu0.b32.cont [15/16] 0.0, 128
        %678 = vxpose.xlu0.b32.end [16/16] 0.0, 128
        %v679 = vpop.trf.xlu0
        %v680 = vpop.trf.xlu0
        %v681 = vpop.trf.xlu0
        %v682 = vpop.trf.xlu0
        %v683 = vpop.trf.xlu0
        %v684 = vpop.trf.xlu0
        %v685 = vpop.trf.xlu0
        %v686 = vpop.trf.xlu0
        %v687 = vpop.trf.xlu0
        %v688 = vpop.trf.xlu0
        %v689 = vpop.trf.xlu0
        %v690 = vpop.trf.xlu0
        %v691 = vpop.trf.xlu0
        %v692 = vpop.trf.xlu0
        %v693 = vpop.trf.xlu0
        %v694 = vpop.trf.xlu0
        %695 = vxpose.xlu0.b32.start [1/16] %v513, 128
        %696 = vxpose.xlu0.b32.cont [2/16] %v516, 128
        %697 = vxpose.xlu0.b32.cont [3/16] 0.0, 128
        %698 = vxpose.xlu0.b32.cont [4/16] 0.0, 128
        %699 = vxpose.xlu0.b32.cont [5/16] 0.0, 128
        %700 = vxpose.xlu0.b32.cont [6/16] 0.0, 128
        %701 = vxpose.xlu0.b32.cont [7/16] 0.0, 128
        %702 = vxpose.xlu0.b32.cont [8/16] 0.0, 128
        %703 = vxpose.xlu0.b32.cont [9/16] 0.0, 128
        %704 = vxpose.xlu0.b32.cont [10/16] 0.0, 128
        %705 = vxpose.xlu0.b32.cont [11/16] 0.0, 128
        %706 = vxpose.xlu0.b32.cont [12/16] 0.0, 128
        %707 = vxpose.xlu0.b32.cont [13/16] 0.0, 128
        %708 = vxpose.xlu0.b32.cont [14/16] 0.0, 128
        %709 = vxpose.xlu0.b32.cont [15/16] 0.0, 128
        %710 = vxpose.xlu0.b32.end [16/16] 0.0, 128
        %v711 = vpop.trf.xlu0
        %v712 = vpop.trf.xlu0
        %v713 = vpop.trf.xlu0
        %v714 = vpop.trf.xlu0
        %v715 = vpop.trf.xlu0
        %v716 = vpop.trf.xlu0
        %v717 = vpop.trf.xlu0
        %v718 = vpop.trf.xlu0
        %v719 = vpop.trf.xlu0
        %v720 = vpop.trf.xlu0
        %v721 = vpop.trf.xlu0
        %v722 = vpop.trf.xlu0
        %v723 = vpop.trf.xlu0
        %v724 = vpop.trf.xlu0
        %v725 = vpop.trf.xlu0
        %v726 = vpop.trf.xlu0
        %727 = vxpose.xlu0.b32.start [1/16] %v521, 128
        %728 = vxpose.xlu0.b32.cont [2/16] %v524, 128
        %729 = vxpose.xlu0.b32.cont [3/16] 0.0, 128
        %730 = vxpose.xlu0.b32.cont [4/16] 0.0, 128
        %731 = vxpose.xlu0.b32.cont [5/16] 0.0, 128
        %732 = vxpose.xlu0.b32.cont [6/16] 0.0, 128
        %733 = vxpose.xlu0.b32.cont [7/16] 0.0, 128
        %734 = vxpose.xlu0.b32.cont [8/16] 0.0, 128
        %735 = vxpose.xlu0.b32.cont [9/16] 0.0, 128
        %736 = vxpose.xlu0.b32.cont [10/16] 0.0, 128
        %737 = vxpose.xlu0.b32.cont [11/16] 0.0, 128
        %738 = vxpose.xlu0.b32.cont [12/16] 0.0, 128
        %739 = vxpose.xlu0.b32.cont [13/16] 0.0, 128
        %740 = vxpose.xlu0.b32.cont [14/16] 0.0, 128
        %741 = vxpose.xlu0.b32.cont [15/16] 0.0, 128
        %742 = vxpose.xlu0.b32.end [16/16] 0.0, 128
        %v743 = vpop.trf.xlu0
        %v744 = vpop.trf.xlu0
        %v745 = vpop.trf.xlu0
        %v746 = vpop.trf.xlu0
        %v747 = vpop.trf.xlu0
        %v748 = vpop.trf.xlu0
        %v749 = vpop.trf.xlu0
        %v750 = vpop.trf.xlu0
        %v751 = vpop.trf.xlu0
        %v752 = vpop.trf.xlu0
        %v753 = vpop.trf.xlu0
        %v754 = vpop.trf.xlu0
        %v755 = vpop.trf.xlu0
        %v756 = vpop.trf.xlu0
        %v757 = vpop.trf.xlu0
        %v758 = vpop.trf.xlu0
        %759 = vxpose.xlu0.b32.start [1/16] %v529, 128
        %760 = vxpose.xlu0.b32.cont [2/16] %v532, 128
        %761 = vxpose.xlu0.b32.cont [3/16] 0.0, 128
        %762 = vxpose.xlu0.b32.cont [4/16] 0.0, 128
        %763 = vxpose.xlu0.b32.cont [5/16] 0.0, 128
        %764 = vxpose.xlu0.b32.cont [6/16] 0.0, 128
        %765 = vxpose.xlu0.b32.cont [7/16] 0.0, 128
        %766 = vxpose.xlu0.b32.cont [8/16] 0.0, 128
        %767 = vxpose.xlu0.b32.cont [9/16] 0.0, 128
        %768 = vxpose.xlu0.b32.cont [10/16] 0.0, 128
        %769 = vxpose.xlu0.b32.cont [11/16] 0.0, 128
        %770 = vxpose.xlu0.b32.cont [12/16] 0.0, 128
        %771 = vxpose.xlu0.b32.cont [13/16] 0.0, 128
        %772 = vxpose.xlu0.b32.cont [14/16] 0.0, 128
        %773 = vxpose.xlu0.b32.cont [15/16] 0.0, 128
        %774 = vxpose.xlu0.b32.end [16/16] 0.0, 128
        %v775 = vpop.trf.xlu0
        %v776 = vpop.trf.xlu0
        %v777 = vpop.trf.xlu0
        %v778 = vpop.trf.xlu0
        %v779 = vpop.trf.xlu0
        %v780 = vpop.trf.xlu0
        %v781 = vpop.trf.xlu0
        %v782 = vpop.trf.xlu0
        %v783 = vpop.trf.xlu0
        %v784 = vpop.trf.xlu0
        %v785 = vpop.trf.xlu0
        %v786 = vpop.trf.xlu0
        %v787 = vpop.trf.xlu0
        %v788 = vpop.trf.xlu0
        %v789 = vpop.trf.xlu0
        %v790 = vpop.trf.xlu0
        %v791 = vpack.c.bf16 %v583, %v551
        %v792 = vpack.c.bf16 %v647, %v615
        %v793 = vpack.c.bf16 %v711, %v679
        %v794 = vpack.c.bf16 %v775, %v743
        %v795 = vld [vmem:[%s3] sm:$0xf]
        %v796 = vld [vmem:[%s3 + $0x4] sm:$0xf]
        %v797 = vld [vmem:[%s4] sm:$0x1]
        %v799 = vlaneseq
        %v800 = vshrl.u32 %v799, 7
        %v801 = vsub.s32 0, %v800
        %v802 = vrot.slane %v797, %v801
        %v806 = vunpack.c.l.b16 %v795
        %v807 = vunpack.c.l.b16 %v796
        %v808 = vpack.c.b16 %v807, %v806
        %vm810 = vcmask 130048
        %v812 = vsel %vm810, %v791, 0
        %v815 = vsel %vm810, %v792, 0
        %v818 = vsel %vm810, %v793, 0
        %v821 = vsel %vm810, %v794, 0
        %823 = vmatprep.subr.bf16.mxu0 0
        %824 = vmatpush1.bf16.msra.mxu0 %v808
        %825 = vmatprep.subr.bf16.mxu0 0
        %826 = vmatpush1.bf16.msra.mxu0 0
        %827 = vmatprep.subr.bf16.mxu0 0
        %828 = vmatpush1.bf16.msra.mxu0 0
        %829 = vmatprep.subr.bf16.mxu0 0
        %830 = vmatpush1.bf16.msra.mxu0 0
        %831 = vmatprep.subr.bf16.mxu0 0
        %832 = vmatpush1.bf16.msra.mxu0 0
        %833 = vmatprep.subr.bf16.mxu0 0
        %834 = vmatpush1.bf16.msra.mxu0 0
        %835 = vmatprep.subr.bf16.mxu0 0
        %836 = vmatpush1.bf16.msra.mxu0 0
        %837 = vmatprep.subr.bf16.mxu0 0
        %838 = vmatpush1.bf16.msra.mxu0 0
        %839 = vmatprep.subr.bf16.mxu0 0
        %840 = vmatpush1.bf16.msra.mxu0 0
        %841 = vmatprep.subr.bf16.mxu0 0
        %842 = vmatpush1.bf16.msra.mxu0 0
        %843 = vmatprep.subr.bf16.mxu0 0
        %844 = vmatpush1.bf16.msra.mxu0 0
        %845 = vmatprep.subr.bf16.mxu0 0
        %846 = vmatpush1.bf16.msra.mxu0 0
        %847 = vmatprep.subr.bf16.mxu0 0
        %848 = vmatpush1.bf16.msra.mxu0 0
        %849 = vmatprep.subr.bf16.mxu0 0
        %850 = vmatpush1.bf16.msra.mxu0 0
        %851 = vmatprep.subr.bf16.mxu0 0
        %852 = vmatpush1.bf16.msra.mxu0 0
        %853 = vmatprep.subr.bf16.mxu0 0
        %854 = vmatpush1.bf16.msra.mxu0 0
        %855 = vmatprep.mubr.bf16.mxu0 0
        %856 = vmatmul.mubr.bf16.gmra.mrb[0].mxu0 %v812
        %v857 = vpop.f32.mrb[0].mxu0
        %v858 = vadd.f32 %v802, %v857
        %v859 = vpop.f32.mrb[0].mxu0
        %v860 = vpop.f32.mrb[0].mxu0
        %v861 = vadd.f32 %v802, %v860
        %v862 = vpop.f32.mrb[0].mxu0
        %863 = vmatprep.mubr.bf16.mxu0 0
        %864 = vmatmul.mubr.bf16.gmra.mrb[0].mxu0 %v815
        %v865 = vpop.f32.mrb[0].mxu0
        %v866 = vadd.f32 %v802, %v865
        %v867 = vpop.f32.mrb[0].mxu0
        %v868 = vpop.f32.mrb[0].mxu0
        %v869 = vadd.f32 %v802, %v868
        %v870 = vpop.f32.mrb[0].mxu0
        %871 = vmatprep.mubr.bf16.mxu0 0
        %872 = vmatmul.mubr.bf16.gmra.mrb[0].mxu0 %v818
        %v873 = vpop.f32.mrb[0].mxu0
        %v874 = vadd.f32 %v802, %v873
        %v875 = vpop.f32.mrb[0].mxu0
        %v876 = vpop.f32.mrb[0].mxu0
        %v877 = vadd.f32 %v802, %v876
        %v878 = vpop.f32.mrb[0].mxu0
        %879 = vmatprep.mubr.bf16.mxu0 0
        %880 = vmatmul.mubr.bf16.gmra.mrb[0].mxu0 %v821
        %v881 = vpop.f32.mrb[0].mxu0
        %v882 = vadd.f32 %v802, %v881
        %v883 = vpop.f32.mrb[0].mxu0
        %v884 = vpop.f32.mrb[0].mxu0
        %v885 = vadd.f32 %v802, %v884
        %v886 = vpop.f32.mrb[0].mxu0
        %887 = vdwg.mxu0
        %v888 = vmul.f32 %v858, 0.5
        %v889 = vmul.f32 %v861, 0.5
        %v890 = vmul.f32 %v866, 0.5
        %v891 = vmul.f32 %v869, 0.5
        %v892 = vmul.f32 %v874, 0.5
        %v893 = vmul.f32 %v877, 0.5
        %v894 = vmul.f32 %v882, 0.5
        %v895 = vmul.f32 %v885, 0.5
        %v896 = vmul.f32 %v858, 0.70710677
        %v897 = vmul.f32 %v861, 0.70710677
        %v898 = vmul.f32 %v866, 0.70710677
        %v899 = vmul.f32 %v869, 0.70710677
        %v900 = vmul.f32 %v874, 0.70710677
        %v901 = vmul.f32 %v877, 0.70710677
        %v902 = vmul.f32 %v882, 0.70710677
        %v903 = vmul.f32 %v885, 0.70710677
        %v904 = verf.f32.pop %v896
        %v905 = verf.f32.pop %v897
        %v906 = verf.f32.pop %v898
        %v907 = verf.f32.pop %v899
        %v908 = verf.f32.pop %v900
        %v909 = verf.f32.pop %v901
        %v910 = verf.f32.pop %v902
        %v911 = verf.f32.pop %v903
        %v912 = vadd.f32 %v904, 1.0
        %v913 = vadd.f32 %v905, 1.0
        %v914 = vadd.f32 %v906, 1.0
        %v915 = vadd.f32 %v907, 1.0
        %v916 = vadd.f32 %v908, 1.0
        %v917 = vadd.f32 %v909, 1.0
        %v918 = vadd.f32 %v910, 1.0
        %v919 = vadd.f32 %v911, 1.0
        %v920 = vmul.f32 %v888, %v912
        %v921 = vmul.f32 %v889, %v913
        %v922 = vmul.f32 %v890, %v914
        %v923 = vmul.f32 %v891, %v915
        %v924 = vmul.f32 %v892, %v916
        %v925 = vmul.f32 %v893, %v917
        %v926 = vmul.f32 %v894, %v918
        %v927 = vmul.f32 %v895, %v919
        %vm928 = vcmask 31744
        %v929 = vsel %vm928, %v920, 0.0
        %930 = vadd.xlane.f32.xlu0 %v929
        %v931 = vpop.xlane.xlu0 %930
        %v932 = vsel %vm928, %v921, 0.0
        %933 = vadd.xlane.f32.xlu0 %v932
        %v934 = vpop.xlane.xlu0 %933
        %v935 = vsel %vm928, %v922, 0.0
        %936 = vadd.xlane.f32.xlu0 %v935
        %v937 = vpop.xlane.xlu0 %936
        %v938 = vsel %vm928, %v923, 0.0
        %939 = vadd.xlane.f32.xlu0 %v938
        %v940 = vpop.xlane.xlu0 %939
        %v941 = vsel %vm928, %v924, 0.0
        %942 = vadd.xlane.f32.xlu0 %v941
        %v943 = vpop.xlane.xlu0 %942
        %v944 = vsel %vm928, %v925, 0.0
        %945 = vadd.xlane.f32.xlu0 %v944
        %v946 = vpop.xlane.xlu0 %945
        %v947 = vsel %vm928, %v926, 0.0
        %948 = vadd.xlane.f32.xlu0 %v947
        %v949 = vpop.xlane.xlu0 %948
        %v950 = vsel %vm928, %v927, 0.0
        %951 = vadd.xlane.f32.xlu0 %v950
        %v952 = vpop.xlane.xlu0 %951
        %v953 = vrot.slane %v931, 4
        %v954 = vadd.f32 %v931, %v953
        %v955 = vrot.slane %v954, 2
        %v956 = vadd.f32 %v954, %v955
        %v957 = vrot.slane %v956, 1
        %v958 = vadd.f32 %v956, %v957
        %v959 = vrot.slane %v934, 4
        %v960 = vadd.f32 %v934, %v959
        %v961 = vrot.slane %v960, 2
        %v962 = vadd.f32 %v960, %v961
        %v963 = vrot.slane %v962, 1
        %v964 = vadd.f32 %v962, %v963
        %v965 = vrot.slane %v937, 4
        %v966 = vadd.f32 %v937, %v965
        %v967 = vrot.slane %v966, 2
        %v968 = vadd.f32 %v966, %v967
        %v969 = vrot.slane %v968, 1
        %v970 = vadd.f32 %v968, %v969
        %v971 = vrot.slane %v940, 4
        %v972 = vadd.f32 %v940, %v971
        %v973 = vrot.slane %v972, 2
        %v974 = vadd.f32 %v972, %v973
        %v975 = vrot.slane %v974, 1
        %v976 = vadd.f32 %v974, %v975
        %v977 = vrot.slane %v943, 4
        %v978 = vadd.f32 %v943, %v977
        %v979 = vrot.slane %v978, 2
        %v980 = vadd.f32 %v978, %v979
        %v981 = vrot.slane %v980, 1
        %v982 = vadd.f32 %v980, %v981
        %v983 = vrot.slane %v946, 4
        %v984 = vadd.f32 %v946, %v983
        %v985 = vrot.slane %v984, 2
        %v986 = vadd.f32 %v984, %v985
        %v987 = vrot.slane %v986, 1
        %v988 = vadd.f32 %v986, %v987
        %v989 = vrot.slane %v949, 4
        %v990 = vadd.f32 %v949, %v989
        %v991 = vrot.slane %v990, 2
        %v992 = vadd.f32 %v990, %v991
        %v993 = vrot.slane %v992, 1
        %v994 = vadd.f32 %v992, %v993
        %v995 = vrot.slane %v952, 4
        %v996 = vadd.f32 %v952, %v995
        %v997 = vrot.slane %v996, 2
        %v998 = vadd.f32 %v996, %v997
        %v999 = vrot.slane %v998, 1
        %v1000 = vadd.f32 %v998, %v999
        %v1001 = vmul.f32 %v920, %v920
        %v1002 = vmul.f32 %v921, %v921
        %v1003 = vmul.f32 %v922, %v922
        %v1004 = vmul.f32 %v923, %v923
        %v1005 = vmul.f32 %v924, %v924
        %v1006 = vmul.f32 %v925, %v925
        %v1007 = vmul.f32 %v926, %v926
        %v1008 = vmul.f32 %v927, %v927
        %v1009 = vsel %vm928, %v1001, 0.0
        %1010 = vadd.xlane.f32.xlu0 %v1009
        %v1011 = vpop.xlane.xlu0 %1010
        %v1012 = vsel %vm928, %v1002, 0.0
        %1013 = vadd.xlane.f32.xlu0 %v1012
        %v1014 = vpop.xlane.xlu0 %1013
        %v1015 = vsel %vm928, %v1003, 0.0
        %1016 = vadd.xlane.f32.xlu0 %v1015
        %v1017 = vpop.xlane.xlu0 %1016
        %v1018 = vsel %vm928, %v1004, 0.0
        %1019 = vadd.xlane.f32.xlu0 %v1018
        %v1020 = vpop.xlane.xlu0 %1019
        %v1021 = vsel %vm928, %v1005, 0.0
        %1022 = vadd.xlane.f32.xlu0 %v1021
        %v1023 = vpop.xlane.xlu0 %1022
        %v1024 = vsel %vm928, %v1006, 0.0
        %1025 = vadd.xlane.f32.xlu0 %v1024
        %v1026 = vpop.xlane.xlu0 %1025
        %v1027 = vsel %vm928, %v1007, 0.0
        %1028 = vadd.xlane.f32.xlu0 %v1027
        %v1029 = vpop.xlane.xlu0 %1028
        %v1030 = vsel %vm928, %v1008, 0.0
        %1031 = vadd.xlane.f32.xlu0 %v1030
        %v1032 = vpop.xlane.xlu0 %1031
        %v1033 = vrot.slane %v1011, 4
        %v1034 = vadd.f32 %v1011, %v1033
        %v1035 = vrot.slane %v1034, 2
        %v1036 = vadd.f32 %v1034, %v1035
        %v1037 = vrot.slane %v1036, 1
        %v1038 = vadd.f32 %v1036, %v1037
        %v1039 = vrot.slane %v1014, 4
        %v1040 = vadd.f32 %v1014, %v1039
        %v1041 = vrot.slane %v1040, 2
        %v1042 = vadd.f32 %v1040, %v1041
        %v1043 = vrot.slane %v1042, 1
        %v1044 = vadd.f32 %v1042, %v1043
        %v1045 = vrot.slane %v1017, 4
        %v1046 = vadd.f32 %v1017, %v1045
        %v1047 = vrot.slane %v1046, 2
        %v1048 = vadd.f32 %v1046, %v1047
        %v1049 = vrot.slane %v1048, 1
        %v1050 = vadd.f32 %v1048, %v1049
        %v1051 = vrot.slane %v1020, 4
        %v1052 = vadd.f32 %v1020, %v1051
        %v1053 = vrot.slane %v1052, 2
        %v1054 = vadd.f32 %v1052, %v1053
        %v1055 = vrot.slane %v1054, 1
        %v1056 = vadd.f32 %v1054, %v1055
        %v1057 = vrot.slane %v1023, 4
        %v1058 = vadd.f32 %v1023, %v1057
        %v1059 = vrot.slane %v1058, 2
        %v1060 = vadd.f32 %v1058, %v1059
        %v1061 = vrot.slane %v1060, 1
        %v1062 = vadd.f32 %v1060, %v1061
        %v1063 = vrot.slane %v1026, 4
        %v1064 = vadd.f32 %v1026, %v1063
        %v1065 = vrot.slane %v1064, 2
        %v1066 = vadd.f32 %v1064, %v1065
        %v1067 = vrot.slane %v1066, 1
        %v1068 = vadd.f32 %v1066, %v1067
        %v1069 = vrot.slane %v1029, 4
        %v1070 = vadd.f32 %v1029, %v1069
        %v1071 = vrot.slane %v1070, 2
        %v1072 = vadd.f32 %v1070, %v1071
        %v1073 = vrot.slane %v1072, 1
        %v1074 = vadd.f32 %v1072, %v1073
        %v1075 = vrot.slane %v1032, 4
        %v1076 = vadd.f32 %v1032, %v1075
        %v1077 = vrot.slane %v1076, 2
        %v1078 = vadd.f32 %v1076, %v1077
        %v1079 = vrot.slane %v1078, 1
        %v1080 = vadd.f32 %v1078, %v1079
        %v1081 = vmul.f32 %v958, 0.03125
        %v1082 = vmul.f32 %v964, 0.03125
        %v1083 = vmul.f32 %v970, 0.03125
        %v1084 = vmul.f32 %v976, 0.03125
        %v1085 = vmul.f32 %v982, 0.03125
        %v1086 = vmul.f32 %v988, 0.03125
        %v1087 = vmul.f32 %v994, 0.03125
        %v1088 = vmul.f32 %v1000, 0.03125
        %v1089 = vmul.f32 %v1038, 0.03125
        %v1090 = vmul.f32 %v1044, 0.03125
        %v1091 = vmul.f32 %v1050, 0.03125
        %v1092 = vmul.f32 %v1056, 0.03125
        %v1093 = vmul.f32 %v1062, 0.03125
        %v1094 = vmul.f32 %v1068, 0.03125
        %v1095 = vmul.f32 %v1074, 0.03125
        %v1096 = vmul.f32 %v1080, 0.03125
        %v1097 = vmul.f32 %v1081, %v1081
        %v1098 = vmul.f32 %v1082, %v1082
        %v1099 = vmul.f32 %v1083, %v1083
        %v1100 = vmul.f32 %v1084, %v1084
        %v1101 = vmul.f32 %v1085, %v1085
        %v1102 = vmul.f32 %v1086, %v1086
        %v1103 = vmul.f32 %v1087, %v1087
        %v1104 = vmul.f32 %v1088, %v1088
        %v1105 = vsub.f32 %v1089, %v1097
        %v1106 = vsub.f32 %v1090, %v1098
        %v1107 = vsub.f32 %v1091, %v1099
        %v1108 = vsub.f32 %v1092, %v1100
        %v1109 = vsub.f32 %v1093, %v1101
        %v1110 = vsub.f32 %v1094, %v1102
        %v1111 = vsub.f32 %v1095, %v1103
        %v1112 = vsub.f32 %v1096, %v1104
        %v1113 = vsub.f32 %v920, %v1081
        %v1114 = vsub.f32 %v921, %v1082
        %v1115 = vsub.f32 %v922, %v1083
        %v1116 = vsub.f32 %v923, %v1084
        %v1117 = vsub.f32 %v924, %v1085
        %v1118 = vsub.f32 %v925, %v1086
        %v1119 = vsub.f32 %v926, %v1087
        %v1120 = vsub.f32 %v927, %v1088
        %v1121 = vadd.f32 %v1105, 1e-05
        %v1122 = vadd.f32 %v1106, 1e-05
        %v1123 = vadd.f32 %v1107, 1e-05
        %v1124 = vadd.f32 %v1108, 1e-05
        %v1125 = vadd.f32 %v1109, 1e-05
        %v1126 = vadd.f32 %v1110, 1e-05
        %v1127 = vadd.f32 %v1111, 1e-05
        %v1128 = vadd.f32 %v1112, 1e-05
        %v1129 = vrsqrt.pop %v1121
        %v1130 = vrsqrt.pop %v1122
        %v1131 = vrsqrt.pop %v1123
        %v1132 = vrsqrt.pop %v1124
        %v1133 = vrsqrt.pop %v1125
        %v1134 = vrsqrt.pop %v1126
        %v1135 = vrsqrt.pop %v1127
        %v1136 = vrsqrt.pop %v1128
        %v1137 = vmul.f32 %v1113, %v1129
        %v1138 = vmul.f32 %v1114, %v1130
        %v1139 = vmul.f32 %v1115, %v1131
        %v1140 = vmul.f32 %v1116, %v1132
        %v1141 = vmul.f32 %v1117, %v1133
        %v1142 = vmul.f32 %v1118, %v1134
        %v1143 = vmul.f32 %v1119, %v1135
        %v1144 = vmul.f32 %v1120, %v1136
        %v1145 = vld [vmem:[%s5] sm:$0xff]
        %v1146 = vmul.f32 %v1137, %v1145
        %v1147 = vmul.f32 %v1138, %v1145
        %v1148 = vmul.f32 %v1139, %v1145
        %v1149 = vmul.f32 %v1140, %v1145
        %v1150 = vmul.f32 %v1141, %v1145
        %v1151 = vmul.f32 %v1142, %v1145
        %v1152 = vmul.f32 %v1143, %v1145
        %v1153 = vmul.f32 %v1144, %v1145
        %v1154 = vld [vmem:[%s6] sm:$0xff]
        %v1155 = vadd.f32 %v1146, %v1154
        %v1156 = vadd.f32 %v1147, %v1154
        %v1157 = vadd.f32 %v1148, %v1154
        %v1158 = vadd.f32 %v1149, %v1154
        %v1159 = vadd.f32 %v1150, %v1154
        %v1160 = vadd.f32 %v1151, %v1154
        %v1161 = vadd.f32 %v1152, %v1154
        %v1162 = vadd.f32 %v1153, %v1154
        %v1171 = vrot.slane %v1156, 7
        %vm1172 = vcmask 1041409
        %v1173 = vsel %vm1172, %v1171, %v1155
        %v1174 = vrot.slane %v1157, 6
        %vm1175 = vcmask 1042434
        %v1176 = vsel %vm1175, %v1174, %v1173
        %v1177 = vrot.slane %v1158, 5
        %vm1178 = vcmask 1043459
        %v1179 = vsel %vm1178, %v1177, %v1176
        %v1180 = vrot.slane %v1159, 4
        %vm1181 = vcmask 1044484
        %v1182 = vsel %vm1181, %v1180, %v1179
        %v1183 = vrot.slane %v1160, 3
        %vm1184 = vcmask 1045509
        %v1185 = vsel %vm1184, %v1183, %v1182
        %v1186 = vrot.slane %v1161, 2
        %vm1187 = vcmask 1046534
        %v1188 = vsel %vm1187, %v1186, %v1185
        %v1189 = vrot.slane %v1162, 1
        %vm1190 = vcmask 1047559
        %v1191 = vsel %vm1190, %v1189, %v1188
        %1193 = vst.msk [vmem:[#allocation2] sm:$0xff] %vm928, %v1191
        %v1194 = vsel %vm1175, %v1171, %v1155
        %v1195 = vsel %vm1178, %v1174, %v1194
        %v1196 = vsel %vm1181, %v1177, %v1195
        %v1197 = vsel %vm1184, %v1180, %v1196
        %v1198 = vsel %vm1187, %v1183, %v1197
        %v1199 = vsel %vm1190, %v1186, %v1198
        %1200 = vrot.lane.b32.xlu0 %v1199, 4
        %v1201 = vpop.permute.xlu0 %1200
        %1202 = vrot.lane.b32.xlu0 %v1189, 4
        %v1203 = vpop.permute.xlu0 %1202
        %vm1206 = vcmask 64545
        %1207 = vst.msk [vmem:[#allocation2 - $0x1] sm:$0xfe] %vm1206, %v1201
        %vm1208 = vcmask 57376
        %1209 = vst.msk [vmem:[#allocation2 + $0x7] sm:$0x1] %vm1208, %v1203
        %v1210 = vsel %vm1178, %v1171, %v1155
        %v1211 = vsel %vm1181, %v1174, %v1210
        %v1212 = vsel %vm1184, %v1177, %v1211
        %v1213 = vsel %vm1187, %v1180, %v1212
        %v1214 = vsel %vm1190, %v1183, %v1213
        %v1215 = vsel %vm1172, %v1189, %v1186
        %1216 = vrot.lane.b32.xlu0 %v1214, 8
        %v1217 = vpop.permute.xlu0 %1216
        %1218 = vrot.lane.b32.xlu0 %v1215, 8
        %v1219 = vpop.permute.xlu0 %1218
        %vm1222 = vcmask 97346
        %1223 = vst.msk [vmem:[#allocation2 - $0x2] sm:$0xfc] %vm1222, %v1217
        %vm1224 = vcmask 91200
        %1225 = vst.msk [vmem:[#allocation2 + $0x6] sm:$0x3] %vm1224, %v1219
        %v1226 = vsel %vm1181, %v1171, %v1155
        %v1227 = vsel %vm1184, %v1174, %v1226
        %v1228 = vsel %vm1187, %v1177, %v1227
        %v1229 = vsel %vm1190, %v1180, %v1228
        %v1230 = vsel %vm1172, %v1186, %v1183
        %v1231 = vsel %vm1175, %v1189, %v1230
        %1232 = vrot.lane.b32.xlu0 %v1229, 12
        %v1233 = vpop.permute.xlu0 %1232
        %1234 = vrot.lane.b32.xlu0 %v1231, 12
        %v1235 = vpop.permute.xlu0 %1234
        %vm1238 = vcmask 130147
        %1239 = vst.msk [vmem:[#allocation2 - $0x3] sm:$0xf8] %vm1238, %v1233
        %vm1240 = vcmask 125024
        %1241 = vst.msk [vmem:[#allocation2 + $0x5] sm:$0x7] %vm1240, %v1235
        %v1242 = vsel %vm1184, %v1171, %v1155
        %v1243 = vsel %vm1187, %v1174, %v1242
        %v1244 = vsel %vm1190, %v1177, %v1243
        %v1245 = vsel %vm1172, %v1183, %v1180
        %v1246 = vsel %vm1175, %v1186, %v1245
        %v1247 = vsel %vm1178, %v1189, %v1246
        %1248 = vrot.lane.b32.xlu0 %v1244, 16
        %v1249 = vpop.permute.xlu0 %1248
        %1250 = vrot.lane.b32.xlu0 %v1247, 16
        %v1251 = vpop.permute.xlu0 %1250
        %vm1254 = vcmask 162948
        %1255 = vst.msk [vmem:[#allocation2 - $0x4] sm:$0xf0] %vm1254, %v1249
        %vm1256 = vcmask 158848
        %1257 = vst.msk [vmem:[#allocation2 + $0x4] sm:$0xf] %vm1256, %v1251
        %v1258 = vsel %vm1187, %v1171, %v1155
        %v1259 = vsel %vm1190, %v1174, %v1258
        %v1260 = vsel %vm1172, %v1180, %v1177
        %v1261 = vsel %vm1175, %v1183, %v1260
        %v1262 = vsel %vm1178, %v1186, %v1261
        %v1263 = vsel %vm1181, %v1189, %v1262
        %1264 = vrot.lane.b32.xlu0 %v1259, 20
        %v1265 = vpop.permute.xlu0 %1264
        %1266 = vrot.lane.b32.xlu0 %v1263, 20
        %v1267 = vpop.permute.xlu0 %1266
        %vm1270 = vcmask 195749
        %1271 = vst.msk [vmem:[#allocation2 - $0x5] sm:$0xe0] %vm1270, %v1265
        %vm1272 = vcmask 192672
        %1273 = vst.msk [vmem:[#allocation2 + $0x3] sm:$0x1f] %vm1272, %v1267
        %v1274 = vsel %vm1190, %v1171, %v1155
        %v1275 = vsel %vm1172, %v1177, %v1174
        %v1276 = vsel %vm1175, %v1180, %v1275
        %v1277 = vsel %vm1178, %v1183, %v1276
        %v1278 = vsel %vm1181, %v1186, %v1277
        %v1279 = vsel %vm1184, %v1189, %v1278
        %1280 = vrot.lane.b32.xlu0 %v1274, 24
        %v1281 = vpop.permute.xlu0 %1280
        %1282 = vrot.lane.b32.xlu0 %v1279, 24
        %v1283 = vpop.permute.xlu0 %1282
        %vm1286 = vcmask 228550
        %1287 = vst.msk [vmem:[#allocation2 - $0x6] sm:$0xc0] %vm1286, %v1281
        %vm1288 = vcmask 226496
        %1289 = vst.msk [vmem:[#allocation2 + $0x2] sm:$0x3f] %vm1288, %v1283
        %v1290 = vsel %vm1172, %v1174, %v1171
        %v1291 = vsel %vm1175, %v1177, %v1290
        %v1292 = vsel %vm1178, %v1180, %v1291
        %v1293 = vsel %vm1181, %v1183, %v1292
        %v1294 = vsel %vm1184, %v1186, %v1293
        %v1295 = vsel %vm1187, %v1189, %v1294
        %1296 = vrot.lane.b32.xlu0 %v1155, 28
        %v1297 = vpop.permute.xlu0 %1296
        %1298 = vrot.lane.b32.xlu0 %v1295, 28
        %v1299 = vpop.permute.xlu0 %1298
        %vm1302 = vcmask 261351
        %1303 = vst.msk [vmem:[#allocation2 - $0x7] sm:$0x80] %vm1302, %v1297
        %vm1304 = vcmask 260320
        %1305 = vst.msk [vmem:[#allocation2 + $0x1] sm:$0x7f] %vm1304, %v1299
        %v1306 = vld [vmem:[#allocation2] sm:$0xff]
        %v1307 = vpack.c.bf16 %v1306, %v1306
        %v1308 = vld [vmem:[%s7] sm:$0xf]
        %v1309 = vld [vmem:[%s7 + $0x4] sm:$0xf]
        %v1310 = vld [vmem:[%s7 + $0x8] sm:$0xf]
        %v1311 = vld [vmem:[%s7 + $0xc] sm:$0xf]
        %v1312 = vld [vmem:[%s8] sm:$0x1]
        %v1314 = vlaneseq
        %v1315 = vshrl.u32 %v1314, 7
        %v1316 = vsub.s32 0, %v1315
        %v1317 = vrot.slane %v1312, %v1316
        %v1323 = vunpack.c.l.b16 %v1308
        %v1324 = vunpack.c.l.b16 %v1309
        %v1325 = vunpack.c.l.b16 %v1310
        %v1326 = vunpack.c.l.b16 %v1311
        %v1327 = vpack.c.b16 %v1324, %v1323
        %v1328 = vpack.c.b16 %v1326, %v1325
        %v1332 = vsel %vm413, %v1307, 0
        %1334 = vmatprep.subr.bf16.mxu0 0
        %1335 = vmatpush1.bf16.msra.mxu0 %v1327
        %1336 = vmatprep.subr.bf16.mxu0 0
        %1337 = vmatpush1.bf16.msra.mxu0 %v1328
        %1338 = vmatprep.subr.bf16.mxu0 0
        %1339 = vmatpush1.bf16.msra.mxu0 0
        %1340 = vmatprep.subr.bf16.mxu0 0
        %1341 = vmatpush1.bf16.msra.mxu0 0
        %1342 = vmatprep.subr.bf16.mxu0 0
        %1343 = vmatpush1.bf16.msra.mxu0 0
        %1344 = vmatprep.subr.bf16.mxu0 0
        %1345 = vmatpush1.bf16.msra.mxu0 0
        %1346 = vmatprep.subr.bf16.mxu0 0
        %1347 = vmatpush1.bf16.msra.mxu0 0
        %1348 = vmatprep.subr.bf16.mxu0 0
        %1349 = vmatpush1.bf16.msra.mxu0 0
        %1350 = vmatprep.subr.bf16.mxu0 0
        %1351 = vmatpush1.bf16.msra.mxu0 0
        %1352 = vmatprep.subr.bf16.mxu0 0
        %1353 = vmatpush1.bf16.msra.mxu0 0
        %1354 = vmatprep.subr.bf16.mxu0 0
        %1355 = vmatpush1.bf16.msra.mxu0 0
        %1356 = vmatprep.subr.bf16.mxu0 0
        %1357 = vmatpush1.bf16.msra.mxu0 0
        %1358 = vmatprep.subr.bf16.mxu0 0
        %1359 = vmatpush1.bf16.msra.mxu0 0
        %1360 = vmatprep.subr.bf16.mxu0 0
        %1361 = vmatpush1.bf16.msra.mxu0 0
        %1362 = vmatprep.subr.bf16.mxu0 0
        %1363 = vmatpush1.bf16.msra.mxu0 0
        %1364 = vmatprep.subr.bf16.mxu0 0
        %1365 = vmatpush1.bf16.msra.mxu0 0
        %1366 = vmatprep.mubr.bf16.mxu0 0
        %1367 = vmatmul.mubr.bf16.gmra.mrb[0].mxu0 %v1332
        %v1368 = vpop.f32.mrb[0].mxu0
        %v1369 = vadd.f32 %v1317, %v1368
        %v1370 = vpop.f32.mrb[0].mxu0
        %v1371 = vpop.f32.mrb[0].mxu0
        %v1372 = vpop.f32.mrb[0].mxu0
        %1373 = vdwg.mxu0
        %1374 = vst [vmem:[%s326] sm:$0xff] %v1369
        %s1375 = sand.u32 %s225, 1
        %s1376 = scalar_lea.sflag [#allocation4], %s1375
        %s1377 = sand.u32 %s225, 1
        %s1378 = smul.addr %s1377, 8
        %s1379 = scalar_lea.vmem [#allocation3], %s1378
        // Predicated region
        $region57: #{tpu_custom_call.1} parent=55 // pred_check
          %p1380 = pneg %p235
        $region58: #{tpu_custom_call.1} parent=55 // pred_check_branch
          %1382 = sbr.rel (%p1380) target = $region60
        $region59: #{tpu_custom_call.1} parent=55 // pred_region
          %s1384 = ssub.s32 128, 128
          %1385 = vsyncadd %s1376, %s1384
          %s1386 = smul.addr %s23, 128
          %s1387 = scalar_lea.hbm %s9, %s1386
          %s1389 = sshll.u32 %s1379, 4
          %s1390 = int_to_ptr.vmem [resolvable:$true] %s1389
          %1392 = dma.vmem_to_hbm [thread:$0]  %s1390, 128, %s1387, %s1376
        $region60: #{tpu_custom_call.1} parent=55 // pred_fallthru
          _
      $region56: #{tpu_custom_call.1} parent=5 // pred_fallthru
        _
      %p1393 = scmp.le.s32.totalorder 2, %s18
      // Predicated region
      $region61: #{tpu_custom_call.1} parent=5 // pred_check
        %p1394 = pneg %p1393
      $region62: #{tpu_custom_call.1} parent=5 // pred_check_branch
        %1396 = sbr.rel (%p1394) target = $region64
      $region63: #{tpu_custom_call.1} parent=5 // pred_region
        %s1397 = ssub.s32 %s18, 2
        // Predicated region
        $region65: #{tpu_custom_call.1} parent=63 // pred_check
          %p1398 = pneg %p241
        $region66: #{tpu_custom_call.1} parent=63 // pred_check_branch
          %1400 = sbr.rel (%p1398) target = $region68
        $region67: #{tpu_custom_call.1} parent=63 // pred_region
          %s1401 = sand.u32 %s226, 1
          %s1402 = scalar_lea.sflag [#allocation4], %s1401
          %s1403 = sand.u32 %s226, 1
          %s1404 = smul.addr %s1403, 8
          %s1405 = scalar_lea.vmem [#allocation3], %s1404
          %1406 = dma.done %s1402, 128
        $region68: #{tpu_custom_call.1} parent=63 // pred_fallthru
          _
      $region64: #{tpu_custom_call.1} parent=5 // pred_fallthru
        _
    $region6: #{tpu_custom_call.1} parent=1 // loop_footer
      %s22 = sadd.s32 1, %s18
    $region7: #{tpu_custom_call.1} parent=1 // loop_footer_branch
      %17 = sbr.rel target = $region3
    $region8: #{tpu_custom_call.1} parent=1 // loop_exit
      _
    %1407 = vsyncpa [#allocation4], 1
    %s1408 = scalar_lea.sflag [#allocation4], 1
    %1409 = vsyncpa %s1408, 1

</llo_original>
